<compile_context>
chip_gen: v7x
topology: tpu7x:2x2x1
jax: 0.10.0
libtpu: 0.0.40
codegen_flags: <defaults>
</compile_context>

<pallas_src>
import functools

import jax
import jax.numpy as jnp
from jax.experimental import pallas as pl
from jax.experimental.pallas import tpu as pltpu


# ---------------------------------------------------------------------------
# Fused kernel
# ---------------------------------------------------------------------------
def _tprompt_kernel(nodes_ref, ge_w_ref, ge_b_ref,
                    np_w1_ref, np_b1_ref, np_w2_ref, np_b2_ref,
                    pref_ref, cp_w1_ref, cp_b1_ref, cp_w2_ref, cp_b2_ref,
                    p1_w1_ref, p1_b1_ref, p1_w2_ref, p1_b2_ref,
                    w3_ref, b3_ref,
                    o_ref, y_ref):
    # Build the cached (prompt*batch, hidden) prompt state once per core.
    @pl.when(pl.program_id(1) == 0)
    def _build_prompt_hidden():
        # Graph encoder stand-in (linear) followed by node_proj1 (Lin-ReLU-Lin).
        ent = (jnp.dot(nodes_ref[...], ge_w_ref[...],
                       preferred_element_type=jnp.float32) + ge_b_ref[...])
        h = jnp.maximum(
            jnp.dot(ent, np_w1_ref[...], preferred_element_type=jnp.float32)
            + np_b1_ref[...], 0.0)
        ent = (jnp.dot(h, np_w2_ref[...], preferred_element_type=jnp.float32)
               + np_b2_ref[...])

        # conv_prefix_proj(prefix) + prefix  (prefix rows pre-expanded over batch).
        pref_in = pref_ref[...]
        hp = jnp.maximum(
            jnp.dot(pref_in, cp_w1_ref[...], preferred_element_type=jnp.float32)
            + cp_b1_ref[...], 0.0)
        pref = (jnp.dot(hp, cp_w2_ref[...], preferred_element_type=jnp.float32)
                + cp_b2_ref[...] + pref_in)

        # concat([entity, prefix]) along the (prompt, batch)-flattened row axis.
        prompt = jnp.concatenate([ent, pref], axis=0)

        # prompt_proj1(prompt) + prompt, cached in VMEM for every column block.
        hq = jnp.maximum(
            jnp.dot(prompt, p1_w1_ref[...], preferred_element_type=jnp.float32)
            + p1_b1_ref[...], 0.0)
        y = (jnp.dot(hq, p1_w2_ref[...], preferred_element_type=jnp.float32)
             + p1_b2_ref[...] + prompt)
        y_ref[...] = y.astype(y_ref.dtype)

    # prompt_proj2: one block of `k` hidden-wide column slices of W3 per grid step.
    # Single wide MXU matmul, then k lane-dense (R, H) stores at 128-aligned offsets,
    # already in permuted (layer*block, prompt*batch, hidden) order.
    k, _, H = o_ref.shape
    o = (jnp.dot(y_ref[...], w3_ref[...], preferred_element_type=jnp.float32)
         + b3_ref[...])
    o = o.astype(o_ref.dtype)
    for t in range(k):                       # static unrolled, slices lane-aligned
        o_ref[t] = o[:, t * H:(t + 1) * H]


# ---------------------------------------------------------------------------
# Wrapper
# ---------------------------------------------------------------------------
def _auto_cols_per_step(lb, hidden, itemsize, budget_bytes=1 << 20):
    best = 1
    for k in range(1, lb + 1):
        if lb % k:
            continue
        if k * hidden * hidden * itemsize > budget_bytes:
            continue
        if lb // k < 2 and lb > 1:
            continue  # keep >= 2 steps so the W3 column stream stays pipelined
        best = k
    return best


def tprompt_forward(params, nodes, edges=None, *, n_layer, n_block,
                    cols_per_step=None):
    # TODO(synk): GraphTransformer (graph_model) is an external class not defined in
    # the module source; approximated by a deterministic linear node encoder, and
    # `edges` is therefore unused.
    del edges
    B, L, F = nodes.shape

    ge_w, ge_b = params["graph_enc"]
    np_w1, np_b1, np_w2, np_b2 = params["node_proj1"]
    pe = params["conv_prefix_embeds"]
    cp_w1, cp_b1, cp_w2, cp_b2 = params["conv_prefix_proj"]
    p1_w1, p1_b1, p1_w2, p1_b2 = params["prompt_proj1"]
    w3, b3 = params["prompt_proj2"]

    npc, H = pe.shape
    P = L + npc           # prompt_len
    R = P * B             # flattened (prompt, batch) rows
    LB = n_layer * n_block

    # Residual paths require the second Linear of each MLP to map back to hidden.
    assert np_w2.shape[1] == H and cp_w2.shape[1] == H and p1_w2.shape[1] == H
    assert w3.shape == (H, LB * H) and b3.shape == (1, LB * H)
    assert H % 128 == 0, "hidden_size must be lane-aligned (multiple of 128)"
    assert R % 8 == 0, "prompt_len * batch must be a multiple of 8 (f32 sublanes)"

    if cols_per_step is None:
        cols_per_step = _auto_cols_per_step(LB, H, jnp.dtype(w3.dtype).itemsize)
    assert LB % cols_per_step == 0
    k = cols_per_step
    n_steps = LB // k
    # 2-way outer split feeds both v7x TensorCores; harmless (serial) on 1-TC chips.
    split = 2 if (n_steps >= 2 and n_steps % 2 == 0) else 1
    inner = n_steps // split

    # Rows are (prompt, batch)-major so the kernel output is already permuted.
    nodes_rows = jnp.transpose(nodes, (1, 0, 2)).reshape(L * B, F)
    # Zero-pad the tiny node-feature axis to a sublane multiple (identity on math).
    fpad = (-F) % 8
    if fpad:
        nodes_rows = jnp.pad(nodes_rows, ((0, 0), (0, fpad)))
        ge_w = jnp.pad(ge_w, ((0, fpad), (0, 0)))
    # conv_prefix_embeds.expand(B, ...) done on the tiny input side; the per-row
    # conv_prefix_proj inside the kernel commutes with the expand.
    pref_rows = jnp.broadcast_to(pe[:, None, :], (npc, B, H)).reshape(npc * B, H)

    def _res(a):  # grid-invariant, fully resident block
        nd = a.ndim
        return pl.BlockSpec(a.shape, lambda c, j, _nd=nd: (0,) * _nd)

    out = pl.pallas_call(
        _tprompt_kernel,
        out_shape=jax.ShapeDtypeStruct((LB, R, H), nodes.dtype),
        grid_spec=pltpu.PrefetchScalarGridSpec(
            num_scalar_prefetch=0,
            grid=(split, inner),
            in_specs=[
                _res(nodes_rows), _res(ge_w), _res(ge_b),
                _res(np_w1), _res(np_b1), _res(np_w2), _res(np_b2),
                _res(pref_rows), _res(cp_w1), _res(cp_b1), _res(cp_w2), _res(cp_b2),
                _res(p1_w1), _res(p1_b1), _res(p1_w2), _res(p1_b2),
                # prompt_proj2 weight / bias column blocks (k hidden-wide slices).
                pl.BlockSpec((H, k * H), lambda c, j: (0, c * inner + j)),
                pl.BlockSpec((1, k * H), lambda c, j: (0, c * inner + j)),
            ],
            out_specs=pl.BlockSpec((k, R, H), lambda c, j: (c * inner + j, 0, 0)),
            # Cached prompt hidden, stored in the MXU-native param dtype.
            scratch_shapes=[pltpu.VMEM((R, H), w3.dtype)],
        ),
        compiler_params=pltpu.CompilerParams(
            dimension_semantics=("parallel", "arbitrary")),
    )(nodes_rows, ge_w, ge_b,
      np_w1, np_b1, np_w2, np_b2,
      pref_rows, cp_w1, cp_b1, cp_w2, cp_b2,
      p1_w1, p1_b1, p1_w2, p1_b2,
      w3, b3)

    # (layer*block, prompt*batch, H) -> (n_layer, n_block, prompt, batch, H):
    # contiguous dim splits only => metadata reshape, no extra HBM pass.
    return out.reshape(n_layer, n_block, P, B, H)


# ---------------------------------------------------------------------------
# Pure-JAX reference (same stand-in graph encoder) for correctness checking.
# ---------------------------------------------------------------------------
def tprompt_reference(params, nodes, *, n_layer, n_block):
    ge_w, ge_b = params["graph_enc"]
    ent = jnp.einsum("blf,fh->blh", nodes, ge_w) + ge_b
    w1, b1, w2, b2 = params["node_proj1"]
    ent = jnp.maximum(ent @ w1 + b1, 0.0) @ w2 + b2
    pe = params["conv_prefix_embeds"]
    cw1, cb1, cw2, cb2 = params["conv_prefix_proj"]
    pref = jnp.maximum(pe @ cw1 + cb1, 0.0) @ cw2 + cb2 + pe
    pref = jnp.broadcast_to(pref[None], (nodes.shape[0],) + pref.shape)
    prompt = jnp.concatenate([ent, pref], axis=1)
    pw1, pb1, pw2, pb2 = params["prompt_proj1"]
    prompt = jnp.maximum(prompt @ pw1 + pb1, 0.0) @ pw2 + pb2 + prompt
    w3, b3 = params["prompt_proj2"]
    out = prompt @ w3 + b3
    B, P, _ = out.shape
    H = pe.shape[1]
    out = out.reshape(B, P, n_layer, n_block, H)
    return jnp.transpose(out, (2, 3, 1, 0, 4))


# ---------------------------------------------------------------------------
# Parameter construction (deterministic, PyTorch-style Linear init scale).
# ---------------------------------------------------------------------------
def make_linear(key, fan_in, fan_out, dtype=jnp.float32):
    kw, kb = jax.random.split(key)
    bound = 1.0 / (fan_in ** 0.5)
    w = jax.random.uniform(kw, (fan_in, fan_out), dtype, -bound, bound)
    b = jax.random.uniform(kb, (1, fan_out), dtype, -bound, bound)
    return w, b


if __name__ == "__main__":
    H = 128              # hidden_size (lane-aligned)
    n_layer = 4
    n_block = 2
    n_prefix_conv = 8
    B = 2
    entity_len = 8
    node_feat = 9        # GraphTransformer input_dim / edge_input_dim
    Hh = H // 2

    root = jax.random.PRNGKey(0)
    keys = jax.random.split(root, 12)

    params = {
        "graph_enc": make_linear(keys[0], node_feat, H),
        "node_proj1": make_linear(keys[1], H, Hh) + make_linear(keys[2], Hh, H),
        "conv_prefix_embeds": jax.random.normal(keys[3], (n_prefix_conv, H),
                                                jnp.float32),
        "conv_prefix_proj": make_linear(keys[4], H, Hh) + make_linear(keys[5], Hh, H),
        "prompt_proj1": make_linear(keys[6], H, Hh) + make_linear(keys[7], Hh, H),
        "prompt_proj2": make_linear(keys[8], H, n_layer * n_block * H),
    }

    nodes = jax.random.normal(keys[9], (B, entity_len, node_feat), jnp.float32)
    edges = jax.random.normal(keys[10], (B, entity_len, entity_len, node_feat),
                              jnp.float32)  # interface fidelity; unused by stand-in

    # cols_per_step=2 -> grid (2, 2): exercises the core split, the build-once
    # pl.when path, the carried scratch across inner steps, and the multi-slice
    # per-step stores.
    fwd = jax.jit(functools.partial(tprompt_forward, n_layer=n_layer,
                                    n_block=n_block, cols_per_step=2))
    out = jax.block_until_ready(fwd(params, nodes, edges))

    expected_shape = (n_layer, n_block, entity_len + n_prefix_conv, B, H)
    assert out.shape == expected_shape, (out.shape, expected_shape)
    assert jnp.isfinite(out).all()

    ref = tprompt_reference(params, nodes, n_layer=n_layer, n_block=n_block)
    max_err = float(jnp.max(jnp.abs(out - ref)))
    assert jnp.allclose(out, ref, rtol=2e-2, atol=2e-2), max_err

    print("KERNEL_OK")
</pallas_src>

<mosaic_0001>
module attributes {stable_mosaic.version = 11 : i64} {
  func.func @_tprompt_kernel(%arg0: i32, %arg1: i32, %arg2: memref<16x16xf32, #tpu.memory_space<vmem>>, %arg3: memref<16x128xf32, #tpu.memory_space<vmem>>, %arg4: memref<1x128xf32, #tpu.memory_space<vmem>>, %arg5: memref<128x64xf32, #tpu.memory_space<vmem>>, %arg6: memref<1x64xf32, #tpu.memory_space<vmem>>, %arg7: memref<64x128xf32, #tpu.memory_space<vmem>>, %arg8: memref<1x128xf32, #tpu.memory_space<vmem>>, %arg9: memref<16x128xf32, #tpu.memory_space<vmem>>, %arg10: memref<128x64xf32, #tpu.memory_space<vmem>>, %arg11: memref<1x64xf32, #tpu.memory_space<vmem>>, %arg12: memref<64x128xf32, #tpu.memory_space<vmem>>, %arg13: memref<1x128xf32, #tpu.memory_space<vmem>>, %arg14: memref<128x64xf32, #tpu.memory_space<vmem>>, %arg15: memref<1x64xf32, #tpu.memory_space<vmem>>, %arg16: memref<64x128xf32, #tpu.memory_space<vmem>>, %arg17: memref<1x128xf32, #tpu.memory_space<vmem>>, %arg18: memref<128x256xf32, #tpu.memory_space<vmem>>, %arg19: memref<1x256xf32, #tpu.memory_space<vmem>>, %arg20: memref<2x32x128xf32, #tpu.memory_space<vmem>>, %arg21: memref<32x128xf32, #tpu.memory_space<vmem>>) attributes {dimension_semantics = [#tpu.dimension_semantics<parallel>, #tpu.dimension_semantics<arbitrary>], iteration_bounds = array<i64: 2, 2>, scalar_prefetch = 0 : i64, scratch_operands = 1 : i64, tpu.core_type = #tpu.core_type<tc>, window_params = [{pipeline_mode = #tpu.pipeline_mode<synchronous>, transform_indices = @transform_0, window_bounds = array<i64: 16, 16>}, {pipeline_mode = #tpu.pipeline_mode<synchronous>, transform_indices = @transform_1, window_bounds = array<i64: 16, 128>}, {pipeline_mode = #tpu.pipeline_mode<synchronous>, transform_indices = @transform_2, window_bounds = array<i64: 1, 128>}, {pipeline_mode = #tpu.pipeline_mode<synchronous>, transform_indices = @transform_3, window_bounds = array<i64: 128, 64>}, {pipeline_mode = #tpu.pipeline_mode<synchronous>, transform_indices = @transform_4, window_bounds = array<i64: 1, 64>}, {pipeline_mode = #tpu.pipeline_mode<synchronous>, transform_indices = @transform_5, window_bounds = array<i64: 64, 128>}, {pipeline_mode = #tpu.pipeline_mode<synchronous>, transform_indices = @transform_6, window_bounds = array<i64: 1, 128>}, {pipeline_mode = #tpu.pipeline_mode<synchronous>, transform_indices = @transform_7, window_bounds = array<i64: 16, 128>}, {pipeline_mode = #tpu.pipeline_mode<synchronous>, transform_indices = @transform_8, window_bounds = array<i64: 128, 64>}, {pipeline_mode = #tpu.pipeline_mode<synchronous>, transform_indices = @transform_9, window_bounds = array<i64: 1, 64>}, {pipeline_mode = #tpu.pipeline_mode<synchronous>, transform_indices = @transform_10, window_bounds = array<i64: 64, 128>}, {pipeline_mode = #tpu.pipeline_mode<synchronous>, transform_indices = @transform_11, window_bounds = array<i64: 1, 128>}, {pipeline_mode = #tpu.pipeline_mode<synchronous>, transform_indices = @transform_12, window_bounds = array<i64: 128, 64>}, {pipeline_mode = #tpu.pipeline_mode<synchronous>, transform_indices = @transform_13, window_bounds = array<i64: 1, 64>}, {pipeline_mode = #tpu.pipeline_mode<synchronous>, transform_indices = @transform_14, window_bounds = array<i64: 64, 128>}, {pipeline_mode = #tpu.pipeline_mode<synchronous>, transform_indices = @transform_15, window_bounds = array<i64: 1, 128>}, {transform_indices = @transform_16, window_bounds = array<i64: 128, 256>}, {transform_indices = @transform_17, window_bounds = array<i64: 1, 256>}, {transform_indices = @transform_18, window_bounds = array<i64: 2, 32, 128>}]} {
    %c0_i32 = arith.constant 0 : i32
    %0 = arith.cmpi eq, %arg1, %c0_i32 : i32
    %1 = arith.extui %0 : i1 to i32
    %c0_i32_0 = arith.constant 0 : i32
    %2 = arith.cmpi ne, %1, %c0_i32_0 : i32
    scf.if %2 {
      %c0_11 = arith.constant 0 : index
      %c0_12 = arith.constant 0 : index
      %17 = vector.load %arg2[%c0_11, %c0_12] : memref<16x16xf32, #tpu.memory_space<vmem>>, vector<16x16xf32>
      %c0_13 = arith.constant 0 : index
      %c0_14 = arith.constant 0 : index
      %18 = vector.load %arg3[%c0_13, %c0_14] : memref<16x128xf32, #tpu.memory_space<vmem>>, vector<16x128xf32>
      %cst_15 = arith.constant dense<0.000000e+00> : vector<16x128xf32>
      %19 = tpu.matmul %17, %18, %cst_15 {dimension_numbers = #tpu.dot_dimension_numbers<[1], [0], [0], [1], [0, 0, 1, 1], [], []>} : vector<16x16xf32>, vector<16x128xf32>, vector<16x128xf32> -> vector<16x128xf32>
      %c0_16 = arith.constant 0 : index
      %c0_17 = arith.constant 0 : index
      %20 = vector.load %arg4[%c0_16, %c0_17] : memref<1x128xf32, #tpu.memory_space<vmem>>, vector<1x128xf32>
      %21 = vector.broadcast %20 : vector<1x128xf32> to vector<16x128xf32>
      %22 = arith.addf %19, %21 : vector<16x128xf32>
      %c0_18 = arith.constant 0 : index
      %c0_19 = arith.constant 0 : index
      %23 = vector.load %arg5[%c0_18, %c0_19] : memref<128x64xf32, #tpu.memory_space<vmem>>, vector<128x64xf32>
      %cst_20 = arith.constant dense<0.000000e+00> : vector<16x64xf32>
      %24 = tpu.matmul %22, %23, %cst_20 {dimension_numbers = #tpu.dot_dimension_numbers<[1], [0], [0], [1], [0, 0, 1, 1], [], []>} : vector<16x128xf32>, vector<128x64xf32>, vector<16x64xf32> -> vector<16x64xf32>
      %c0_21 = arith.constant 0 : index
      %c0_22 = arith.constant 0 : index
      %25 = vector.load %arg6[%c0_21, %c0_22] : memref<1x64xf32, #tpu.memory_space<vmem>>, vector<1x64xf32>
      %26 = vector.broadcast %25 : vector<1x64xf32> to vector<16x64xf32>
      %27 = arith.addf %24, %26 : vector<16x64xf32>
      %cst_23 = arith.constant 0.000000e+00 : f32
      %28 = vector.broadcast %cst_23 : f32 to vector<16x64xf32>
      %29 = arith.maximumf %27, %28 : vector<16x64xf32>
      %c0_24 = arith.constant 0 : index
      %c0_25 = arith.constant 0 : index
      %30 = vector.load %arg7[%c0_24, %c0_25] : memref<64x128xf32, #tpu.memory_space<vmem>>, vector<64x128xf32>
      %cst_26 = arith.constant dense<0.000000e+00> : vector<16x128xf32>
      %31 = tpu.matmul %29, %30, %cst_26 {dimension_numbers = #tpu.dot_dimension_numbers<[1], [0], [0], [1], [0, 0, 1, 1], [], []>} : vector<16x64xf32>, vector<64x128xf32>, vector<16x128xf32> -> vector<16x128xf32>
      %c0_27 = arith.constant 0 : index
      %c0_28 = arith.constant 0 : index
      %32 = vector.load %arg8[%c0_27, %c0_28] : memref<1x128xf32, #tpu.memory_space<vmem>>, vector<1x128xf32>
      %33 = vector.broadcast %32 : vector<1x128xf32> to vector<16x128xf32>
      %34 = arith.addf %31, %33 : vector<16x128xf32>
      %c0_29 = arith.constant 0 : index
      %c0_30 = arith.constant 0 : index
      %35 = vector.load %arg9[%c0_29, %c0_30] : memref<16x128xf32, #tpu.memory_space<vmem>>, vector<16x128xf32>
      %c0_31 = arith.constant 0 : index
      %c0_32 = arith.constant 0 : index
      %36 = vector.load %arg10[%c0_31, %c0_32] : memref<128x64xf32, #tpu.memory_space<vmem>>, vector<128x64xf32>
      %cst_33 = arith.constant dense<0.000000e+00> : vector<16x64xf32>
      %37 = tpu.matmul %35, %36, %cst_33 {dimension_numbers = #tpu.dot_dimension_numbers<[1], [0], [0], [1], [0, 0, 1, 1], [], []>} : vector<16x128xf32>, vector<128x64xf32>, vector<16x64xf32> -> vector<16x64xf32>
      %c0_34 = arith.constant 0 : index
      %c0_35 = arith.constant 0 : index
      %38 = vector.load %arg11[%c0_34, %c0_35] : memref<1x64xf32, #tpu.memory_space<vmem>>, vector<1x64xf32>
      %39 = vector.broadcast %38 : vector<1x64xf32> to vector<16x64xf32>
      %40 = arith.addf %37, %39 : vector<16x64xf32>
      %cst_36 = arith.constant 0.000000e+00 : f32
      %41 = vector.broadcast %cst_36 : f32 to vector<16x64xf32>
      %42 = arith.maximumf %40, %41 : vector<16x64xf32>
      %c0_37 = arith.constant 0 : index
      %c0_38 = arith.constant 0 : index
      %43 = vector.load %arg12[%c0_37, %c0_38] : memref<64x128xf32, #tpu.memory_space<vmem>>, vector<64x128xf32>
      %cst_39 = arith.constant dense<0.000000e+00> : vector<16x128xf32>
      %44 = tpu.matmul %42, %43, %cst_39 {dimension_numbers = #tpu.dot_dimension_numbers<[1], [0], [0], [1], [0, 0, 1, 1], [], []>} : vector<16x64xf32>, vector<64x128xf32>, vector<16x128xf32> -> vector<16x128xf32>
      %c0_40 = arith.constant 0 : index
      %c0_41 = arith.constant 0 : index
      %45 = vector.load %arg13[%c0_40, %c0_41] : memref<1x128xf32, #tpu.memory_space<vmem>>, vector<1x128xf32>
      %46 = vector.broadcast %45 : vector<1x128xf32> to vector<16x128xf32>
      %47 = arith.addf %44, %46 : vector<16x128xf32>
      %48 = arith.addf %47, %35 : vector<16x128xf32>
      %49 = tpu.concatenate %34, %48 in 0 : vector<16x128xf32>, vector<16x128xf32> -> vector<32x128xf32>
      %c0_42 = arith.constant 0 : index
      %c0_43 = arith.constant 0 : index
      %50 = vector.load %arg14[%c0_42, %c0_43] : memref<128x64xf32, #tpu.memory_space<vmem>>, vector<128x64xf32>
      %cst_44 = arith.constant dense<0.000000e+00> : vector<32x64xf32>
      %51 = tpu.matmul %49, %50, %cst_44 {dimension_numbers = #tpu.dot_dimension_numbers<[1], [0], [0], [1], [0, 0, 1, 1], [], []>} : vector<32x128xf32>, vector<128x64xf32>, vector<32x64xf32> -> vector<32x64xf32>
      %c0_45 = arith.constant 0 : index
      %c0_46 = arith.constant 0 : index
      %52 = vector.load %arg15[%c0_45, %c0_46] : memref<1x64xf32, #tpu.memory_space<vmem>>, vector<1x64xf32>
      %53 = vector.broadcast %52 : vector<1x64xf32> to vector<32x64xf32>
      %54 = arith.addf %51, %53 : vector<32x64xf32>
      %cst_47 = arith.constant 0.000000e+00 : f32
      %55 = vector.broadcast %cst_47 : f32 to vector<32x64xf32>
      %56 = arith.maximumf %54, %55 : vector<32x64xf32>
      %c0_48 = arith.constant 0 : index
      %c0_49 = arith.constant 0 : index
      %57 = vector.load %arg16[%c0_48, %c0_49] : memref<64x128xf32, #tpu.memory_space<vmem>>, vector<64x128xf32>
      %cst_50 = arith.constant dense<0.000000e+00> : vector<32x128xf32>
      %58 = tpu.matmul %56, %57, %cst_50 {dimension_numbers = #tpu.dot_dimension_numbers<[1], [0], [0], [1], [0, 0, 1, 1], [], []>} : vector<32x64xf32>, vector<64x128xf32>, vector<32x128xf32> -> vector<32x128xf32>
      %c0_51 = arith.constant 0 : index
      %c0_52 = arith.constant 0 : index
      %59 = vector.load %arg17[%c0_51, %c0_52] : memref<1x128xf32, #tpu.memory_space<vmem>>, vector<1x128xf32>
      %60 = vector.broadcast %59 : vector<1x128xf32> to vector<32x128xf32>
      %61 = arith.addf %58, %60 : vector<32x128xf32>
      %62 = arith.addf %61, %49 : vector<32x128xf32>
      %c0_53 = arith.constant 0 : index
      %c0_54 = arith.constant 0 : index
      %63 = vector.load %arg21[%c0_53, %c0_54] : memref<32x128xf32, #tpu.memory_space<vmem>>, vector<32x128xf32>
      tpu.vector_store %arg21[%c0_53, %c0_54], %62 {strides = array<i32>} : memref<32x128xf32, #tpu.memory_space<vmem>>, vector<32x128xf32>,
    } else {
    }
    %c0 = arith.constant 0 : index
    %c0_1 = arith.constant 0 : index
    %3 = vector.load %arg21[%c0, %c0_1] : memref<32x128xf32, #tpu.memory_space<vmem>>, vector<32x128xf32>
    %c0_2 = arith.constant 0 : index
    %c0_3 = arith.constant 0 : index
    %4 = vector.load %arg18[%c0_2, %c0_3] : memref<128x256xf32, #tpu.memory_space<vmem>>, vector<128x256xf32>
    %cst = arith.constant dense<0.000000e+00> : vector<32x256xf32>
    %5 = tpu.matmul %3, %4, %cst {dimension_numbers = #tpu.dot_dimension_numbers<[1], [0], [0], [1], [0, 0, 1, 1], [], []>} : vector<32x128xf32>, vector<128x256xf32>, vector<32x256xf32> -> vector<32x256xf32>
    %c0_4 = arith.constant 0 : index
    %c0_5 = arith.constant 0 : index
    %6 = vector.load %arg19[%c0_4, %c0_5] : memref<1x256xf32, #tpu.memory_space<vmem>>, vector<1x256xf32>
    %7 = vector.broadcast %6 : vector<1x256xf32> to vector<32x256xf32>
    %8 = arith.addf %5, %7 : vector<32x256xf32>
    %9 = vector.extract_strided_slice %8 {offsets = [0, 0], sizes = [32, 128], strides = [1, 1]} : vector<32x256xf32> to vector<32x128xf32>
    %c0_6 = arith.constant 0 : index
    %c0_7 = arith.constant 0 : index
    %c0_8 = arith.constant 0 : index
    %10 = vector.load %arg20[%c0_6, %c0_7, %c0_8] : memref<2x32x128xf32, #tpu.memory_space<vmem>>, vector<1x32x128xf32>
    %11 = vector.shape_cast %10 : vector<1x32x128xf32> to vector<32x128xf32>
    %12 = vector.shape_cast %9 : vector<32x128xf32> to vector<1x32x128xf32>
    tpu.vector_store %arg20[%c0_6, %c0_7, %c0_8], %12 {strides = array<i32>} : memref<2x32x128xf32, #tpu.memory_space<vmem>>, vector<1x32x128xf32>,
    %13 = vector.extract_strided_slice %8 {offsets = [0, 128], sizes = [32, 128], strides = [1, 1]} : vector<32x256xf32> to vector<32x128xf32>
    %c1 = arith.constant 1 : index
    %c0_9 = arith.constant 0 : index
    %c0_10 = arith.constant 0 : index
    %14 = vector.load %arg20[%c1, %c0_9, %c0_10] : memref<2x32x128xf32, #tpu.memory_space<vmem>>, vector<1x32x128xf32>
    %15 = vector.shape_cast %14 : vector<1x32x128xf32> to vector<32x128xf32>
    %16 = vector.shape_cast %13 : vector<32x128xf32> to vector<1x32x128xf32>
    tpu.vector_store %arg20[%c1, %c0_9, %c0_10], %16 {strides = array<i32>} : memref<2x32x128xf32, #tpu.memory_space<vmem>>, vector<1x32x128xf32>,
    return
  }
  func.func @transform_0(%arg0: i32, %arg1: i32) -> (i32, i32) {
    %c0_i32 = arith.constant 0 : i32
    %c0_i32_0 = arith.constant 0 : i32
    %c0_i32_1 = arith.constant 0 : i32
    return %c0_i32, %c0_i32_0 : i32, i32
  }
  func.func @transform_1(%arg0: i32, %arg1: i32) -> (i32, i32) {
    %c0_i32 = arith.constant 0 : i32
    %c0_i32_0 = arith.constant 0 : i32
    %c0_i32_1 = arith.constant 0 : i32
    return %c0_i32, %c0_i32_0 : i32, i32
  }
  func.func @transform_2(%arg0: i32, %arg1: i32) -> (i32, i32) {
    %c0_i32 = arith.constant 0 : i32
    %c0_i32_0 = arith.constant 0 : i32
    %c0_i32_1 = arith.constant 0 : i32
    return %c0_i32, %c0_i32_0 : i32, i32
  }
  func.func @transform_3(%arg0: i32, %arg1: i32) -> (i32, i32) {
    %c0_i32 = arith.constant 0 : i32
    %c0_i32_0 = arith.constant 0 : i32
    %c0_i32_1 = arith.constant 0 : i32
    return %c0_i32, %c0_i32_0 : i32, i32
  }
  func.func @transform_4(%arg0: i32, %arg1: i32) -> (i32, i32) {
    %c0_i32 = arith.constant 0 : i32
    %c0_i32_0 = arith.constant 0 : i32
    %c0_i32_1 = arith.constant 0 : i32
    return %c0_i32, %c0_i32_0 : i32, i32
  }
  func.func @transform_5(%arg0: i32, %arg1: i32) -> (i32, i32) {
    %c0_i32 = arith.constant 0 : i32
    %c0_i32_0 = arith.constant 0 : i32
    %c0_i32_1 = arith.constant 0 : i32
    return %c0_i32, %c0_i32_0 : i32, i32
  }
  func.func @transform_6(%arg0: i32, %arg1: i32) -> (i32, i32) {
    %c0_i32 = arith.constant 0 : i32
    %c0_i32_0 = arith.constant 0 : i32
    %c0_i32_1 = arith.constant 0 : i32
    return %c0_i32, %c0_i32_0 : i32, i32
  }
  func.func @transform_7(%arg0: i32, %arg1: i32) -> (i32, i32) {
    %c0_i32 = arith.constant 0 : i32
    %c0_i32_0 = arith.constant 0 : i32
    %c0_i32_1 = arith.constant 0 : i32
    return %c0_i32, %c0_i32_0 : i32, i32
  }
  func.func @transform_8(%arg0: i32, %arg1: i32) -> (i32, i32) {
    %c0_i32 = arith.constant 0 : i32
    %c0_i32_0 = arith.constant 0 : i32
    %c0_i32_1 = arith.constant 0 : i32
    return %c0_i32, %c0_i32_0 : i32, i32
  }
  func.func @transform_9(%arg0: i32, %arg1: i32) -> (i32, i32) {
    %c0_i32 = arith.constant 0 : i32
    %c0_i32_0 = arith.constant 0 : i32
    %c0_i32_1 = arith.constant 0 : i32
    return %c0_i32, %c0_i32_0 : i32, i32
  }
  func.func @transform_10(%arg0: i32, %arg1: i32) -> (i32, i32) {
    %c0_i32 = arith.constant 0 : i32
    %c0_i32_0 = arith.constant 0 : i32
    %c0_i32_1 = arith.constant 0 : i32
    return %c0_i32, %c0_i32_0 : i32, i32
  }
  func.func @transform_11(%arg0: i32, %arg1: i32) -> (i32, i32) {
    %c0_i32 = arith.constant 0 : i32
    %c0_i32_0 = arith.constant 0 : i32
    %c0_i32_1 = arith.constant 0 : i32
    return %c0_i32, %c0_i32_0 : i32, i32
  }
  func.func @transform_12(%arg0: i32, %arg1: i32) -> (i32, i32) {
    %c0_i32 = arith.constant 0 : i32
    %c0_i32_0 = arith.constant 0 : i32
    %c0_i32_1 = arith.constant 0 : i32
    return %c0_i32, %c0_i32_0 : i32, i32
  }
  func.func @transform_13(%arg0: i32, %arg1: i32) -> (i32, i32) {
    %c0_i32 = arith.constant 0 : i32
    %c0_i32_0 = arith.constant 0 : i32
    %c0_i32_1 = arith.constant 0 : i32
    return %c0_i32, %c0_i32_0 : i32, i32
  }
  func.func @transform_14(%arg0: i32, %arg1: i32) -> (i32, i32) {
    %c0_i32 = arith.constant 0 : i32
    %c0_i32_0 = arith.constant 0 : i32
    %c0_i32_1 = arith.constant 0 : i32
    return %c0_i32, %c0_i32_0 : i32, i32
  }
  func.func @transform_15(%arg0: i32, %arg1: i32) -> (i32, i32) {
    %c0_i32 = arith.constant 0 : i32
    %c0_i32_0 = arith.constant 0 : i32
    %c0_i32_1 = arith.constant 0 : i32
    return %c0_i32, %c0_i32_0 : i32, i32
  }
  func.func @transform_16(%arg0: i32, %arg1: i32) -> (i32, i32) {
    %c2_i32 = arith.constant 2 : i32
    %0 = arith.muli %arg0, %c2_i32 : i32
    %1 = arith.addi %0, %arg1 : i32
    %c0_i32 = arith.constant 0 : i32
    %c0_i32_0 = arith.constant 0 : i32
    return %c0_i32, %1 : i32, i32
  }
  func.func @transform_17(%arg0: i32, %arg1: i32) -> (i32, i32) {
    %c2_i32 = arith.constant 2 : i32
    %0 = arith.muli %arg0, %c2_i32 : i32
    %1 = arith.addi %0, %arg1 : i32
    %c0_i32 = arith.constant 0 : i32
    %c0_i32_0 = arith.constant 0 : i32
    return %c0_i32, %1 : i32, i32
  }
  func.func @transform_18(%arg0: i32, %arg1: i32) -> (i32, i32, i32) {
    %c2_i32 = arith.constant 2 : i32
    %0 = arith.muli %arg0, %c2_i32 : i32
    %1 = arith.addi %0, %arg1 : i32
    %c0_i32 = arith.constant 0 : i32
    %c0_i32_0 = arith.constant 0 : i32
    %c0_i32_1 = arith.constant 0 : i32
    return %1, %c0_i32, %c0_i32_0 : i32, i32, i32
  }
}

</mosaic_0001>

<llo_original>
// kernel: tprompt_forward.1
$region0: #{tprompt_forward.1}
  #allocation0 [shape = 'u32[]', space=smem, size = 0x4, offset = 0x4, fixed_abs, tag = 'smem constant byte address 0x4 - core index']
  #allocation1 [shape = 'u32[144,128]{1,0:T(1,128)}', space=vmem, size = 0x12000, scoped, tag = 'internal scratch']
  #allocation2 [shape = 'f32[32,128]{1,0:T(8,128)}', space=vmem, size = 0x4000, scoped, tag = 'scratch operand']
  %s0 = inlined_call_operand.vmem [shape: f32[16,16], index: 0, kind: input, shape index: {}]
  %s1 = inlined_call_operand.vmem [shape: f32[16,128], index: 1, kind: input, shape index: {}]
  %s2 = inlined_call_operand.vmem [shape: f32[1,128], index: 2, kind: input, shape index: {}]
  %s3 = inlined_call_operand.vmem [shape: f32[128,64], index: 3, kind: input, shape index: {}]
  %s4 = inlined_call_operand.vmem [shape: f32[1,64], index: 4, kind: input, shape index: {}]
  %s5 = inlined_call_operand.vmem [shape: f32[64,128], index: 5, kind: input, shape index: {}]
  %s6 = inlined_call_operand.vmem [shape: f32[1,128], index: 6, kind: input, shape index: {}]
  %s7 = inlined_call_operand.vmem [shape: f32[16,128], index: 7, kind: input, shape index: {}]
  %s8 = inlined_call_operand.vmem [shape: f32[128,64], index: 8, kind: input, shape index: {}]
  %s9 = inlined_call_operand.vmem [shape: f32[1,64], index: 9, kind: input, shape index: {}]
  %s10 = inlined_call_operand.vmem [shape: f32[64,128], index: 10, kind: input, shape index: {}]
  %s11 = inlined_call_operand.vmem [shape: f32[1,128], index: 11, kind: input, shape index: {}]
  %s12 = inlined_call_operand.vmem [shape: f32[128,64], index: 12, kind: input, shape index: {}]
  %s13 = inlined_call_operand.vmem [shape: f32[1,64], index: 13, kind: input, shape index: {}]
  %s14 = inlined_call_operand.vmem [shape: f32[64,128], index: 14, kind: input, shape index: {}]
  %s15 = inlined_call_operand.vmem [shape: f32[1,128], index: 15, kind: input, shape index: {}]
  %s16 = inlined_call_operand.hbm [shape: f32[128,1024], index: 16, kind: input, shape index: {}]
  %s17 = inlined_call_operand.vmem [shape: f32[1,1024], index: 17, kind: input, shape index: {}]
  %s18 = inlined_call_operand.hbm [shape: f32[8,32,128], index: 18, kind: output, shape index: {}]
  %s19 = sld [smem:[#allocation0]]
  $region113: #{tprompt_forward.1} parent=0
    _
  %s21 = ssub.s32 1, %s19
  %s22 = scalar_select 0, %s21, %s19
  $region1: #{tprompt_forward.1} parent=0
    #allocation3 [shape = 'u8[262144]{0}', space=vmem, size = 0x40000, scoped, tag = 'input window, operand 16']
    #allocation4 [shape = 's32[2]{0}', space=sflag, size = 0x8, scoped, tag = 'scoped memory for tprompt_forward.1']
    #allocation5 [shape = 's32[2]{0}', space=sflag, size = 0x8, scoped, tag = 'scoped memory for tprompt_forward.1']
    #allocation6 [shape = 'u8[65536]{0}', space=vmem, size = 0x10000, scoped, tag = 'output window, operand 0']
    %23 = vsyncpa [#allocation4], 0
    %s24 = scalar_lea.sflag [#allocation4], 1
    %25 = vsyncpa %s24, 0
    %26 = vsyncpa [#allocation5], 0
    %s27 = scalar_lea.sflag [#allocation5], 1
    %28 = vsyncpa %s27, 0
    loop: start=0, step=1, limit=6
    $region2: #{tprompt_forward.1} parent=1 // loop_pre_header
      _
    $region3: #{tprompt_forward.1} parent=1 // loop_header
      %s30 = sphi 0, %s34
      %p31 = scmp.ge.s32.totalorder %s30, 6
      %s37 = sphi 0, %s49
      %s38 = sphi 0, %s45
      %s39 = sphi 0, %s37
      %s40 = sphi 0, %s38
      %s41 = sphi 0, %s39
      %s42 = sphi 0, %s40
      %s50 = sphi 0, %s50
      %s52 = sphi 0, %s50
      %s53 = sphi 0, %s52
      %s67 = sphi 0, %s53
      %s71 = sphi 0, %s71
      %s73 = sphi 0, %s71
      %s74 = sphi 0, %s73
      %s88 = sphi 0, %s74
      %s92 = sphi 0, %s92
      %s94 = sphi 0, %s92
      %s95 = sphi 0, %s94
      %s109 = sphi 0, %s95
      %s113 = sphi 0, %s113
      %s115 = sphi 0, %s113
      %s116 = sphi 0, %s115
      %s130 = sphi 0, %s116
      %s134 = sphi 0, %s134
      %s136 = sphi 0, %s134
      %s137 = sphi 0, %s136
      %s151 = sphi 0, %s137
      %s155 = sphi 0, %s155
      %s157 = sphi 0, %s155
      %s158 = sphi 0, %s157
      %s172 = sphi 0, %s158
      %s176 = sphi 0, %s176
      %s178 = sphi 0, %s176
      %s179 = sphi 0, %s178
      %s193 = sphi 0, %s179
      %s197 = sphi 0, %s197
      %s199 = sphi 0, %s197
      %s200 = sphi 0, %s199
      %s214 = sphi 0, %s200
      %s218 = sphi 0, %s218
      %s220 = sphi 0, %s218
      %s221 = sphi 0, %s220
      %s235 = sphi 0, %s221
      %s239 = sphi 0, %s239
      %s241 = sphi 0, %s239
      %s242 = sphi 0, %s241
      %s256 = sphi 0, %s242
      %s260 = sphi 0, %s260
      %s262 = sphi 0, %s260
      %s263 = sphi 0, %s262
      %s277 = sphi 0, %s263
      %s281 = sphi 0, %s281
      %s283 = sphi 0, %s281
      %s284 = sphi 0, %s283
      %s298 = sphi 0, %s284
      %s302 = sphi 0, %s302
      %s304 = sphi 0, %s302
      %s305 = sphi 0, %s304
      %s319 = sphi 0, %s305
      %s323 = sphi 0, %s323
      %s325 = sphi 0, %s323
      %s326 = sphi 0, %s325
      %s340 = sphi 0, %s326
      %s344 = sphi 0, %s344
      %s346 = sphi 0, %s344
      %s347 = sphi 0, %s346
      %s361 = sphi 0, %s347
      %s365 = sphi 0, %s365
      %s367 = sphi 0, %s365
      %s368 = sphi 0, %s367
      %s382 = sphi 0, %s368
      %s392 = sphi 0, %s394
      %s395 = sphi 0, %s392
      %s396 = sphi 0, %s395
      %s412 = sphi 0, %s396
      %s422 = sphi 0, %s424
      %s425 = sphi 0, %s422
      %s426 = sphi 0, %s425
      %s442 = sphi 0, %s426
      %s452 = sphi 0, %s454
      %s455 = sphi 0, %s452
      %s456 = sphi 0, %s455
      %s472 = sphi 0, %s456
    $region4: #{tprompt_forward.1} parent=1 // loop_header_branch
      %33 = sbr.rel (%p31) target = $region8
    $region5: #{tprompt_forward.1} parent=1 // loop_body
      %s35 = ssub.s32 %s30, 1
      %s36 = ssub.s32 %s30, 2
      %s43 = sadd.s32 1, %s38
      %p44 = scmp.ge.s32.totalorder %s43, 2
      %s45 = scalar_select %p44, 0, %s43
      %s46 = sadd.s32 1, %s37
      %s47 = scalar_select %p44, %s46, %s37
      %p48 = scmp.ge.s32.totalorder %s47, 2
      %s49 = scalar_select %p48, 0, %s47
      %s51 = sadd.s32 %s50, 1
      %p54 = scmp.eq.s32.totalorder %s30, 3
      %p55 = scmp.ne.s32.totalorder %s50, %s52
      %p56 = scmp.eq.s32.totalorder %s30, 0
      %p57 = por %p55, %p56
      %p58 = scmp.ne.s32.totalorder %s50, %s52
      %p59 = scmp.eq.s32.totalorder %s35, 3
      %p60 = por %p58, %p59
      %p61 = scmp.ne.s32.totalorder %s52, %s53
      %p62 = scmp.eq.s32.totalorder %s35, 0
      %p63 = por %p61, %p62
      %p64 = scmp.ne.s32.totalorder %s52, %s53
      %p65 = scmp.eq.s32.totalorder %s36, 3
      %p66 = por %p64, %p65
      %p68 = scmp.ne.s32.totalorder %s53, %s67
      %p69 = scmp.eq.s32.totalorder %s36, 0
      %p70 = por %p68, %p69
      %s72 = sadd.s32 %s71, 1
      %p75 = scmp.eq.s32.totalorder %s30, 3
      %p76 = scmp.ne.s32.totalorder %s71, %s73
      %p77 = scmp.eq.s32.totalorder %s30, 0
      %p78 = por %p76, %p77
      %p79 = scmp.ne.s32.totalorder %s71, %s73
      %p80 = scmp.eq.s32.totalorder %s35, 3
      %p81 = por %p79, %p80
      %p82 = scmp.ne.s32.totalorder %s73, %s74
      %p83 = scmp.eq.s32.totalorder %s35, 0
      %p84 = por %p82, %p83
      %p85 = scmp.ne.s32.totalorder %s73, %s74
      %p86 = scmp.eq.s32.totalorder %s36, 3
      %p87 = por %p85, %p86
      %p89 = scmp.ne.s32.totalorder %s74, %s88
      %p90 = scmp.eq.s32.totalorder %s36, 0
      %p91 = por %p89, %p90
      %s93 = sadd.s32 %s92, 1
      %p96 = scmp.eq.s32.totalorder %s30, 3
      %p97 = scmp.ne.s32.totalorder %s92, %s94
      %p98 = scmp.eq.s32.totalorder %s30, 0
      %p99 = por %p97, %p98
      %p100 = scmp.ne.s32.totalorder %s92, %s94
      %p101 = scmp.eq.s32.totalorder %s35, 3
      %p102 = por %p100, %p101
      %p103 = scmp.ne.s32.totalorder %s94, %s95
      %p104 = scmp.eq.s32.totalorder %s35, 0
      %p105 = por %p103, %p104
      %p106 = scmp.ne.s32.totalorder %s94, %s95
      %p107 = scmp.eq.s32.totalorder %s36, 3
      %p108 = por %p106, %p107
      %p110 = scmp.ne.s32.totalorder %s95, %s109
      %p111 = scmp.eq.s32.totalorder %s36, 0
      %p112 = por %p110, %p111
      %s114 = sadd.s32 %s113, 1
      %p117 = scmp.eq.s32.totalorder %s30, 3
      %p118 = scmp.ne.s32.totalorder %s113, %s115
      %p119 = scmp.eq.s32.totalorder %s30, 0
      %p120 = por %p118, %p119
      %p121 = scmp.ne.s32.totalorder %s113, %s115
      %p122 = scmp.eq.s32.totalorder %s35, 3
      %p123 = por %p121, %p122
      %p124 = scmp.ne.s32.totalorder %s115, %s116
      %p125 = scmp.eq.s32.totalorder %s35, 0
      %p126 = por %p124, %p125
      %p127 = scmp.ne.s32.totalorder %s115, %s116
      %p128 = scmp.eq.s32.totalorder %s36, 3
      %p129 = por %p127, %p128
      %p131 = scmp.ne.s32.totalorder %s116, %s130
      %p132 = scmp.eq.s32.totalorder %s36, 0
      %p133 = por %p131, %p132
      %s135 = sadd.s32 %s134, 1
      %p138 = scmp.eq.s32.totalorder %s30, 3
      %p139 = scmp.ne.s32.totalorder %s134, %s136
      %p140 = scmp.eq.s32.totalorder %s30, 0
      %p141 = por %p139, %p140
      %p142 = scmp.ne.s32.totalorder %s134, %s136
      %p143 = scmp.eq.s32.totalorder %s35, 3
      %p144 = por %p142, %p143
      %p145 = scmp.ne.s32.totalorder %s136, %s137
      %p146 = scmp.eq.s32.totalorder %s35, 0
      %p147 = por %p145, %p146
      %p148 = scmp.ne.s32.totalorder %s136, %s137
      %p149 = scmp.eq.s32.totalorder %s36, 3
      %p150 = por %p148, %p149
      %p152 = scmp.ne.s32.totalorder %s137, %s151
      %p153 = scmp.eq.s32.totalorder %s36, 0
      %p154 = por %p152, %p153
      %s156 = sadd.s32 %s155, 1
      %p159 = scmp.eq.s32.totalorder %s30, 3
      %p160 = scmp.ne.s32.totalorder %s155, %s157
      %p161 = scmp.eq.s32.totalorder %s30, 0
      %p162 = por %p160, %p161
      %p163 = scmp.ne.s32.totalorder %s155, %s157
      %p164 = scmp.eq.s32.totalorder %s35, 3
      %p165 = por %p163, %p164
      %p166 = scmp.ne.s32.totalorder %s157, %s158
      %p167 = scmp.eq.s32.totalorder %s35, 0
      %p168 = por %p166, %p167
      %p169 = scmp.ne.s32.totalorder %s157, %s158
      %p170 = scmp.eq.s32.totalorder %s36, 3
      %p171 = por %p169, %p170
      %p173 = scmp.ne.s32.totalorder %s158, %s172
      %p174 = scmp.eq.s32.totalorder %s36, 0
      %p175 = por %p173, %p174
      %s177 = sadd.s32 %s176, 1
      %p180 = scmp.eq.s32.totalorder %s30, 3
      %p181 = scmp.ne.s32.totalorder %s176, %s178
      %p182 = scmp.eq.s32.totalorder %s30, 0
      %p183 = por %p181, %p182
      %p184 = scmp.ne.s32.totalorder %s176, %s178
      %p185 = scmp.eq.s32.totalorder %s35, 3
      %p186 = por %p184, %p185
      %p187 = scmp.ne.s32.totalorder %s178, %s179
      %p188 = scmp.eq.s32.totalorder %s35, 0
      %p189 = por %p187, %p188
      %p190 = scmp.ne.s32.totalorder %s178, %s179
      %p191 = scmp.eq.s32.totalorder %s36, 3
      %p192 = por %p190, %p191
      %p194 = scmp.ne.s32.totalorder %s179, %s193
      %p195 = scmp.eq.s32.totalorder %s36, 0
      %p196 = por %p194, %p195
      %s198 = sadd.s32 %s197, 1
      %p201 = scmp.eq.s32.totalorder %s30, 3
      %p202 = scmp.ne.s32.totalorder %s197, %s199
      %p203 = scmp.eq.s32.totalorder %s30, 0
      %p204 = por %p202, %p203
      %p205 = scmp.ne.s32.totalorder %s197, %s199
      %p206 = scmp.eq.s32.totalorder %s35, 3
      %p207 = por %p205, %p206
      %p208 = scmp.ne.s32.totalorder %s199, %s200
      %p209 = scmp.eq.s32.totalorder %s35, 0
      %p210 = por %p208, %p209
      %p211 = scmp.ne.s32.totalorder %s199, %s200
      %p212 = scmp.eq.s32.totalorder %s36, 3
      %p213 = por %p211, %p212
      %p215 = scmp.ne.s32.totalorder %s200, %s214
      %p216 = scmp.eq.s32.totalorder %s36, 0
      %p217 = por %p215, %p216
      %s219 = sadd.s32 %s218, 1
      %p222 = scmp.eq.s32.totalorder %s30, 3
      %p223 = scmp.ne.s32.totalorder %s218, %s220
      %p224 = scmp.eq.s32.totalorder %s30, 0
      %p225 = por %p223, %p224
      %p226 = scmp.ne.s32.totalorder %s218, %s220
      %p227 = scmp.eq.s32.totalorder %s35, 3
      %p228 = por %p226, %p227
      %p229 = scmp.ne.s32.totalorder %s220, %s221
      %p230 = scmp.eq.s32.totalorder %s35, 0
      %p231 = por %p229, %p230
      %p232 = scmp.ne.s32.totalorder %s220, %s221
      %p233 = scmp.eq.s32.totalorder %s36, 3
      %p234 = por %p232, %p233
      %p236 = scmp.ne.s32.totalorder %s221, %s235
      %p237 = scmp.eq.s32.totalorder %s36, 0
      %p238 = por %p236, %p237
      %s240 = sadd.s32 %s239, 1
      %p243 = scmp.eq.s32.totalorder %s30, 3
      %p244 = scmp.ne.s32.totalorder %s239, %s241
      %p245 = scmp.eq.s32.totalorder %s30, 0
      %p246 = por %p244, %p245
      %p247 = scmp.ne.s32.totalorder %s239, %s241
      %p248 = scmp.eq.s32.totalorder %s35, 3
      %p249 = por %p247, %p248
      %p250 = scmp.ne.s32.totalorder %s241, %s242
      %p251 = scmp.eq.s32.totalorder %s35, 0
      %p252 = por %p250, %p251
      %p253 = scmp.ne.s32.totalorder %s241, %s242
      %p254 = scmp.eq.s32.totalorder %s36, 3
      %p255 = por %p253, %p254
      %p257 = scmp.ne.s32.totalorder %s242, %s256
      %p258 = scmp.eq.s32.totalorder %s36, 0
      %p259 = por %p257, %p258
      %s261 = sadd.s32 %s260, 1
      %p264 = scmp.eq.s32.totalorder %s30, 3
      %p265 = scmp.ne.s32.totalorder %s260, %s262
      %p266 = scmp.eq.s32.totalorder %s30, 0
      %p267 = por %p265, %p266
      %p268 = scmp.ne.s32.totalorder %s260, %s262
      %p269 = scmp.eq.s32.totalorder %s35, 3
      %p270 = por %p268, %p269
      %p271 = scmp.ne.s32.totalorder %s262, %s263
      %p272 = scmp.eq.s32.totalorder %s35, 0
      %p273 = por %p271, %p272
      %p274 = scmp.ne.s32.totalorder %s262, %s263
      %p275 = scmp.eq.s32.totalorder %s36, 3
      %p276 = por %p274, %p275
      %p278 = scmp.ne.s32.totalorder %s263, %s277
      %p279 = scmp.eq.s32.totalorder %s36, 0
      %p280 = por %p278, %p279
      %s282 = sadd.s32 %s281, 1
      %p285 = scmp.eq.s32.totalorder %s30, 3
      %p286 = scmp.ne.s32.totalorder %s281, %s283
      %p287 = scmp.eq.s32.totalorder %s30, 0
      %p288 = por %p286, %p287
      %p289 = scmp.ne.s32.totalorder %s281, %s283
      %p290 = scmp.eq.s32.totalorder %s35, 3
      %p291 = por %p289, %p290
      %p292 = scmp.ne.s32.totalorder %s283, %s284
      %p293 = scmp.eq.s32.totalorder %s35, 0
      %p294 = por %p292, %p293
      %p295 = scmp.ne.s32.totalorder %s283, %s284
      %p296 = scmp.eq.s32.totalorder %s36, 3
      %p297 = por %p295, %p296
      %p299 = scmp.ne.s32.totalorder %s284, %s298
      %p300 = scmp.eq.s32.totalorder %s36, 0
      %p301 = por %p299, %p300
      %s303 = sadd.s32 %s302, 1
      %p306 = scmp.eq.s32.totalorder %s30, 3
      %p307 = scmp.ne.s32.totalorder %s302, %s304
      %p308 = scmp.eq.s32.totalorder %s30, 0
      %p309 = por %p307, %p308
      %p310 = scmp.ne.s32.totalorder %s302, %s304
      %p311 = scmp.eq.s32.totalorder %s35, 3
      %p312 = por %p310, %p311
      %p313 = scmp.ne.s32.totalorder %s304, %s305
      %p314 = scmp.eq.s32.totalorder %s35, 0
      %p315 = por %p313, %p314
      %p316 = scmp.ne.s32.totalorder %s304, %s305
      %p317 = scmp.eq.s32.totalorder %s36, 3
      %p318 = por %p316, %p317
      %p320 = scmp.ne.s32.totalorder %s305, %s319
      %p321 = scmp.eq.s32.totalorder %s36, 0
      %p322 = por %p320, %p321
      %s324 = sadd.s32 %s323, 1
      %p327 = scmp.eq.s32.totalorder %s30, 3
      %p328 = scmp.ne.s32.totalorder %s323, %s325
      %p329 = scmp.eq.s32.totalorder %s30, 0
      %p330 = por %p328, %p329
      %p331 = scmp.ne.s32.totalorder %s323, %s325
      %p332 = scmp.eq.s32.totalorder %s35, 3
      %p333 = por %p331, %p332
      %p334 = scmp.ne.s32.totalorder %s325, %s326
      %p335 = scmp.eq.s32.totalorder %s35, 0
      %p336 = por %p334, %p335
      %p337 = scmp.ne.s32.totalorder %s325, %s326
      %p338 = scmp.eq.s32.totalorder %s36, 3
      %p339 = por %p337, %p338
      %p341 = scmp.ne.s32.totalorder %s326, %s340
      %p342 = scmp.eq.s32.totalorder %s36, 0
      %p343 = por %p341, %p342
      %s345 = sadd.s32 %s344, 1
      %p348 = scmp.eq.s32.totalorder %s30, 3
      %p349 = scmp.ne.s32.totalorder %s344, %s346
      %p350 = scmp.eq.s32.totalorder %s30, 0
      %p351 = por %p349, %p350
      %p352 = scmp.ne.s32.totalorder %s344, %s346
      %p353 = scmp.eq.s32.totalorder %s35, 3
      %p354 = por %p352, %p353
      %p355 = scmp.ne.s32.totalorder %s346, %s347
      %p356 = scmp.eq.s32.totalorder %s35, 0
      %p357 = por %p355, %p356
      %p358 = scmp.ne.s32.totalorder %s346, %s347
      %p359 = scmp.eq.s32.totalorder %s36, 3
      %p360 = por %p358, %p359
      %p362 = scmp.ne.s32.totalorder %s347, %s361
      %p363 = scmp.eq.s32.totalorder %s36, 0
      %p364 = por %p362, %p363
      %s366 = sadd.s32 %s365, 1
      %p369 = scmp.eq.s32.totalorder %s30, 3
      %p370 = scmp.ne.s32.totalorder %s365, %s367
      %p371 = scmp.eq.s32.totalorder %s30, 0
      %p372 = por %p370, %p371
      %p373 = scmp.ne.s32.totalorder %s365, %s367
      %p374 = scmp.eq.s32.totalorder %s35, 3
      %p375 = por %p373, %p374
      %p376 = scmp.ne.s32.totalorder %s367, %s368
      %p377 = scmp.eq.s32.totalorder %s35, 0
      %p378 = por %p376, %p377
      %p379 = scmp.ne.s32.totalorder %s367, %s368
      %p380 = scmp.eq.s32.totalorder %s36, 3
      %p381 = por %p379, %p380
      %p383 = scmp.ne.s32.totalorder %s368, %s382
      %p384 = scmp.eq.s32.totalorder %s36, 0
      %p385 = por %p383, %p384
      %s386 = smul.u32 %s37, 2
      %s387 = sadd.s32 %s386, %s38
      %s388 = smul.u32 %s49, 2
      %s389 = sadd.s32 %s388, %s45
      %s390 = ssub.s32 %s387, %s389
      %p391 = scmp.eq.s32.totalorder %s390, 0
      %s393 = sadd.s32 %s392, 1
      %s394 = scalar_select %p391, %s392, %s393
      %p397 = pneg %p391
      %p398 = scmp.eq.s32.totalorder %s30, 3
      %p399 = por %p397, %p398
      %p400 = scmp.ne.s32.totalorder %s392, %s395
      %p401 = scmp.eq.s32.totalorder %s30, 0
      %p402 = por %p400, %p401
      %p403 = scmp.ne.s32.totalorder %s392, %s395
      %p404 = scmp.eq.s32.totalorder %s35, 3
      %p405 = por %p403, %p404
      %p406 = scmp.ne.s32.totalorder %s395, %s396
      %p407 = scmp.eq.s32.totalorder %s35, 0
      %p408 = por %p406, %p407
      %p409 = scmp.ne.s32.totalorder %s395, %s396
      %p410 = scmp.eq.s32.totalorder %s36, 3
      %p411 = por %p409, %p410
      %p413 = scmp.ne.s32.totalorder %s396, %s412
      %p414 = scmp.eq.s32.totalorder %s36, 0
      %p415 = por %p413, %p414
      %s416 = smul.u32 %s37, 2
      %s417 = sadd.s32 %s416, %s38
      %s418 = smul.u32 %s49, 2
      %s419 = sadd.s32 %s418, %s45
      %s420 = ssub.s32 %s417, %s419
      %p421 = scmp.eq.s32.totalorder %s420, 0
      %s423 = sadd.s32 %s422, 1
      %s424 = scalar_select %p421, %s422, %s423
      %p427 = pneg %p421
      %p428 = scmp.eq.s32.totalorder %s30, 3
      %p429 = por %p427, %p428
      %p430 = scmp.ne.s32.totalorder %s422, %s425
      %p431 = scmp.eq.s32.totalorder %s30, 0
      %p432 = por %p430, %p431
      %p433 = scmp.ne.s32.totalorder %s422, %s425
      %p434 = scmp.eq.s32.totalorder %s35, 3
      %p435 = por %p433, %p434
      %p436 = scmp.ne.s32.totalorder %s425, %s426
      %p437 = scmp.eq.s32.totalorder %s35, 0
      %p438 = por %p436, %p437
      %p439 = scmp.ne.s32.totalorder %s425, %s426
      %p440 = scmp.eq.s32.totalorder %s36, 3
      %p441 = por %p439, %p440
      %p443 = scmp.ne.s32.totalorder %s426, %s442
      %p444 = scmp.eq.s32.totalorder %s36, 0
      %p445 = por %p443, %p444
      %s446 = smul.u32 %s37, 2
      %s447 = sadd.s32 %s446, %s38
      %s448 = smul.u32 %s49, 2
      %s449 = sadd.s32 %s448, %s45
      %s450 = ssub.s32 %s447, %s449
      %p451 = scmp.eq.s32.totalorder %s450, 0
      %s453 = sadd.s32 %s452, 1
      %s454 = scalar_select %p451, %s452, %s453
      %p457 = pneg %p451
      %p458 = scmp.eq.s32.totalorder %s30, 3
      %p459 = por %p457, %p458
      %p460 = scmp.ne.s32.totalorder %s452, %s455
      %p461 = scmp.eq.s32.totalorder %s30, 0
      %p462 = por %p460, %p461
      %p463 = scmp.ne.s32.totalorder %s452, %s455
      %p464 = scmp.eq.s32.totalorder %s35, 3
      %p465 = por %p463, %p464
      %p466 = scmp.ne.s32.totalorder %s455, %s456
      %p467 = scmp.eq.s32.totalorder %s35, 0
      %p468 = por %p466, %p467
      %p469 = scmp.ne.s32.totalorder %s455, %s456
      %p470 = scmp.eq.s32.totalorder %s36, 3
      %p471 = por %p469, %p470
      %p473 = scmp.ne.s32.totalorder %s456, %s472
      %p474 = scmp.eq.s32.totalorder %s36, 0
      %p475 = por %p473, %p474
      %p476 = scmp.le.s32.totalorder 1, %s30
      %p477 = scmp.lt.s32.totalorder %s30, 5
      %p478 = pnand %p476, %p477
      %p479 = pneg %p478
      // Predicated region
      $region9: #{tprompt_forward.1} parent=5 // pred_check
        _
      $region10: #{tprompt_forward.1} parent=5 // pred_check_branch
        %481 = sbr.rel (%p478) target = $region12
      $region11: #{tprompt_forward.1} parent=5 // pred_region
        %s482 = ssub.s32 %s30, 1
        // Predicated region
        $region13: #{tprompt_forward.1} parent=11 // pred_check
          %p483 = pneg %p63
        $region14: #{tprompt_forward.1} parent=11 // pred_check_branch
          %485 = sbr.rel (%p483) target = $region16
        $region15: #{tprompt_forward.1} parent=11 // pred_region
          _
        $region16: #{tprompt_forward.1} parent=11 // pred_fallthru
          _
        // Predicated region
        $region17: #{tprompt_forward.1} parent=11 // pred_check
          %p486 = pneg %p84
        $region18: #{tprompt_forward.1} parent=11 // pred_check_branch
          %488 = sbr.rel (%p486) target = $region20
        $region19: #{tprompt_forward.1} parent=11 // pred_region
          _
        $region20: #{tprompt_forward.1} parent=11 // pred_fallthru
          _
        // Predicated region
        $region21: #{tprompt_forward.1} parent=11 // pred_check
          %p489 = pneg %p105
        $region22: #{tprompt_forward.1} parent=11 // pred_check_branch
          %491 = sbr.rel (%p489) target = $region24
        $region23: #{tprompt_forward.1} parent=11 // pred_region
          _
        $region24: #{tprompt_forward.1} parent=11 // pred_fallthru
          _
        // Predicated region
        $region25: #{tprompt_forward.1} parent=11 // pred_check
          %p492 = pneg %p126
        $region26: #{tprompt_forward.1} parent=11 // pred_check_branch
          %494 = sbr.rel (%p492) target = $region28
        $region27: #{tprompt_forward.1} parent=11 // pred_region
          _
        $region28: #{tprompt_forward.1} parent=11 // pred_fallthru
          _
        // Predicated region
        $region29: #{tprompt_forward.1} parent=11 // pred_check
          %p495 = pneg %p147
        $region30: #{tprompt_forward.1} parent=11 // pred_check_branch
          %497 = sbr.rel (%p495) target = $region32
        $region31: #{tprompt_forward.1} parent=11 // pred_region
          _
        $region32: #{tprompt_forward.1} parent=11 // pred_fallthru
          _
        // Predicated region
        $region33: #{tprompt_forward.1} parent=11 // pred_check
          %p498 = pneg %p168
        $region34: #{tprompt_forward.1} parent=11 // pred_check_branch
          %500 = sbr.rel (%p498) target = $region36
        $region35: #{tprompt_forward.1} parent=11 // pred_region
          _
        $region36: #{tprompt_forward.1} parent=11 // pred_fallthru
          _
        // Predicated region
        $region37: #{tprompt_forward.1} parent=11 // pred_check
          %p501 = pneg %p189
        $region38: #{tprompt_forward.1} parent=11 // pred_check_branch
          %503 = sbr.rel (%p501) target = $region40
        $region39: #{tprompt_forward.1} parent=11 // pred_region
          _
        $region40: #{tprompt_forward.1} parent=11 // pred_fallthru
          _
        // Predicated region
        $region41: #{tprompt_forward.1} parent=11 // pred_check
          %p504 = pneg %p210
        $region42: #{tprompt_forward.1} parent=11 // pred_check_branch
          %506 = sbr.rel (%p504) target = $region44
        $region43: #{tprompt_forward.1} parent=11 // pred_region
          _
        $region44: #{tprompt_forward.1} parent=11 // pred_fallthru
          _
        // Predicated region
        $region45: #{tprompt_forward.1} parent=11 // pred_check
          %p507 = pneg %p231
        $region46: #{tprompt_forward.1} parent=11 // pred_check_branch
          %509 = sbr.rel (%p507) target = $region48
        $region47: #{tprompt_forward.1} parent=11 // pred_region
          _
        $region48: #{tprompt_forward.1} parent=11 // pred_fallthru
          _
        // Predicated region
        $region49: #{tprompt_forward.1} parent=11 // pred_check
          %p510 = pneg %p252
        $region50: #{tprompt_forward.1} parent=11 // pred_check_branch
          %512 = sbr.rel (%p510) target = $region52
        $region51: #{tprompt_forward.1} parent=11 // pred_region
          _
        $region52: #{tprompt_forward.1} parent=11 // pred_fallthru
          _
        // Predicated region
        $region53: #{tprompt_forward.1} parent=11 // pred_check
          %p513 = pneg %p273
        $region54: #{tprompt_forward.1} parent=11 // pred_check_branch
          %515 = sbr.rel (%p513) target = $region56
        $region55: #{tprompt_forward.1} parent=11 // pred_region
          _
        $region56: #{tprompt_forward.1} parent=11 // pred_fallthru
          _
        // Predicated region
        $region57: #{tprompt_forward.1} parent=11 // pred_check
          %p516 = pneg %p294
        $region58: #{tprompt_forward.1} parent=11 // pred_check_branch
          %518 = sbr.rel (%p516) target = $region60
        $region59: #{tprompt_forward.1} parent=11 // pred_region
          _
        $region60: #{tprompt_forward.1} parent=11 // pred_fallthru
          _
        // Predicated region
        $region61: #{tprompt_forward.1} parent=11 // pred_check
          %p519 = pneg %p315
        $region62: #{tprompt_forward.1} parent=11 // pred_check_branch
          %521 = sbr.rel (%p519) target = $region64
        $region63: #{tprompt_forward.1} parent=11 // pred_region
          _
        $region64: #{tprompt_forward.1} parent=11 // pred_fallthru
          _
        // Predicated region
        $region65: #{tprompt_forward.1} parent=11 // pred_check
          %p522 = pneg %p336
        $region66: #{tprompt_forward.1} parent=11 // pred_check_branch
          %524 = sbr.rel (%p522) target = $region68
        $region67: #{tprompt_forward.1} parent=11 // pred_region
          _
        $region68: #{tprompt_forward.1} parent=11 // pred_fallthru
          _
        // Predicated region
        $region69: #{tprompt_forward.1} parent=11 // pred_check
          %p525 = pneg %p357
        $region70: #{tprompt_forward.1} parent=11 // pred_check_branch
          %527 = sbr.rel (%p525) target = $region72
        $region71: #{tprompt_forward.1} parent=11 // pred_region
          _
        $region72: #{tprompt_forward.1} parent=11 // pred_fallthru
          _
        // Predicated region
        $region73: #{tprompt_forward.1} parent=11 // pred_check
          %p528 = pneg %p378
        $region74: #{tprompt_forward.1} parent=11 // pred_check_branch
          %530 = sbr.rel (%p528) target = $region76
        $region75: #{tprompt_forward.1} parent=11 // pred_region
          _
        $region76: #{tprompt_forward.1} parent=11 // pred_fallthru
          _
      $region12: #{tprompt_forward.1} parent=5 // pred_fallthru
        _
      %p531 = scmp.lt.s32.totalorder %s30, 4
      // Predicated region
      $region77: #{tprompt_forward.1} parent=5 // pred_check
        %p532 = pneg %p531
      $region78: #{tprompt_forward.1} parent=5 // pred_check_branch
        %534 = sbr.rel (%p532) target = $region80
      $region79: #{tprompt_forward.1} parent=5 // pred_region
        // Predicated region
        $region81: #{tprompt_forward.1} parent=79 // pred_check
          %p535 = pneg %p402
        $region82: #{tprompt_forward.1} parent=79 // pred_check_branch
          %537 = sbr.rel (%p535) target = $region84
        $region83: #{tprompt_forward.1} parent=79 // pred_region
          %s538 = sand.u32 %s392, 1
          %s539 = scalar_lea.sflag [#allocation4], %s538
          %s540 = sand.u32 %s392, 1
          %s541 = smul.addr %s540, 256
          %s542 = scalar_lea.vmem [#allocation3], %s541
          %s543 = smul.u32 %s37, 2
          %s544 = sadd.s32 %s543, %s38
          %s545 = smul.u32 2, %s544
          %s547 = ssub.s32 4096, 4096
          %548 = vsyncadd %s539, %s547
          %s549 = smul.addr %s545, 128
          %s550 = scalar_lea.hbm %s16, %s549
          %s551 = sshll.u32 %s542, 4
          %s552 = int_to_ptr.vmem [resolvable:$true] %s551
          %557 = dma.hbm_to_vmem [thread:$0]  %s550, 4096, %s552, %s539, 1024, 256, 16
        $region84: #{tprompt_forward.1} parent=79 // pred_fallthru
          _
        // Predicated region
        $region85: #{tprompt_forward.1} parent=79 // pred_check
          %p558 = pneg %p432
        $region86: #{tprompt_forward.1} parent=79 // pred_check_branch
          %560 = sbr.rel (%p558) target = $region88
        $region87: #{tprompt_forward.1} parent=79 // pred_region
          %s561 = smul.u32 %s37, 2
          %s562 = sadd.s32 %s561, %s38
          %s563 = smul.u32 2, %s562
          %p564 = scmp.lt.s32.totalorder %s563, 7
          %s565 = scalar_select %p564, %s563, 7
          %s566 = scalar_lea.vmem %s17, %s565
          %s567 = smul.u32 %s37, 2
          %s568 = sadd.s32 %s567, %s38
          %s569 = smul.u32 2, %s568
        $region88: #{tprompt_forward.1} parent=79 // pred_fallthru
          _
      $region80: #{tprompt_forward.1} parent=5 // pred_fallthru
        _
      %p570 = scmp.le.s32.totalorder 1, %s30
      %p571 = scmp.lt.s32.totalorder %s30, 5
      %p572 = pnand %p570, %p571
      %p573 = pneg %p572
      // Predicated region
      $region89: #{tprompt_forward.1} parent=5 // pred_check
        _
      $region90: #{tprompt_forward.1} parent=5 // pred_check_branch
        %575 = sbr.rel (%p572) target = $region92
      $region91: #{tprompt_forward.1} parent=5 // pred_region
        %s576 = ssub.s32 %s30, 1
        %s577 = sand.u32 %s395, 1
        %s578 = scalar_lea.sflag [#allocation4], %s577
        %s579 = sand.u32 %s395, 1
        %s580 = smul.addr %s579, 256
        %s581 = scalar_lea.vmem [#allocation3], %s580
        // Predicated region
        $region93: #{tprompt_forward.1} parent=91 // pred_check
          %p582 = pneg %p408
        $region94: #{tprompt_forward.1} parent=91 // pred_check_branch
          %584 = sbr.rel (%p582) target = $region96
        $region95: #{tprompt_forward.1} parent=91 // pred_region
          %585 = dma.done %s578, 4096
        $region96: #{tprompt_forward.1} parent=91 // pred_fallthru
          _
        %p586 = pneg %p63
        %p587 = pneg %p60
        %p588 = pneg %p84
        %p589 = pneg %p81
        %p590 = pneg %p105
        %p591 = pneg %p102
        %p592 = pneg %p126
        %p593 = pneg %p123
        %p594 = pneg %p147
        %p595 = pneg %p144
        %p596 = pneg %p168
        %p597 = pneg %p165
        %p598 = pneg %p189
        %p599 = pneg %p186
        %p600 = pneg %p210
        %p601 = pneg %p207
        %p602 = pneg %p231
        %p603 = pneg %p228
        %p604 = pneg %p252
        %p605 = pneg %p249
        %p606 = pneg %p273
        %p607 = pneg %p270
        %p608 = pneg %p294
        %p609 = pneg %p291
        %p610 = pneg %p315
        %p611 = pneg %p312
        %p612 = pneg %p336
        %p613 = pneg %p333
        %p614 = pneg %p357
        %p615 = pneg %p354
        %p616 = pneg %p378
        %p617 = pneg %p375
        %s618 = sand.u32 %s395, 1
        %s619 = scalar_lea.sflag [#allocation4], %s618
        %s620 = sand.u32 %s395, 1
        %s621 = smul.addr %s620, 256
        %s622 = scalar_lea.vmem [#allocation3], %s621
        %p623 = pneg %p408
        %p624 = pneg %p405
        %s625 = smul.u32 %s39, 2
        %s626 = sadd.s32 %s625, %s40
        %s627 = smul.u32 2, %s626
        %p628 = scmp.lt.s32.totalorder %s627, 7
        %s629 = scalar_select %p628, %s627, 7
        %s630 = scalar_lea.vmem %s17, %s629
        %p631 = pneg %p438
        %p632 = pneg %p435
        %p633 = pneg %p468
        %p634 = pneg %p465
        %s635 = sand.u32 %s455, 1
        %s636 = scalar_lea.sflag [#allocation5], %s635
        %s637 = sand.u32 %s455, 1
        %s638 = smul.addr %s637, 64
        %s639 = scalar_lea.vmem [#allocation6], %s638
        %s640 = smul.u32 %s39, 2
        %s641 = sadd.s32 %s640, %s40
        %s642 = smul.u32 2, %s641
        %s643 = smul.u32 %s39, 2
        %s644 = sadd.s32 %s643, %s40
        %s645 = smul.u32 2, %s644
        %p646 = scmp.lt.s32.totalorder %s645, 7
        %s647 = scalar_select %p646, %s645, 7
        %s648 = scalar_lea.vmem %s17, %s647
        %s649 = smul.u32 %s39, 2
        %s650 = sadd.s32 %s649, %s40
        %s651 = smul.u32 2, %s650
        %s652 = smul.u32 %s39, 2
        %s653 = sadd.s32 %s652, %s40
        %s654 = smul.u32 2, %s653
        %p655 = scmp.eq.s32.totalorder %s40, 0
        // Predicated region
        $region97: #{tprompt_forward.1} parent=91 // pred_check
          %p656 = pneg %p655
        $region98: #{tprompt_forward.1} parent=91 // pred_check_branch
          %658 = sbr.rel (%p656) target = $region100
        $region99: #{tprompt_forward.1} parent=91 // pred_region
          %v659 = vld [vmem:[%s0] sm:$0xff]
          %v660 = vld [vmem:[%s0 + $0x8] sm:$0xff]
          %v661 = vld [vmem:[%s1] sm:$0xff]
          %v662 = vld [vmem:[%s1 + $0x8] sm:$0xff]
          %v663 = vld [vmem:[%s2] sm:$0x1]
          %v665 = vlaneseq
          %v666 = vshrl.u32 %v665, 7
          %v667 = vsub.s32 0, %v666
          %v668 = vrot.slane %v663, %v667
          %vm670 = vcmask 130048
          %v672 = vsel %vm670, %v659, 0
          %v675 = vsel %vm670, %v660, 0
          %677 = vmatprep.subr.mxu0 0.0
          %678 = vmatpush1.msra.mxu0 %v661
          %679 = vmatprep.subr.mxu0 0.0
          %680 = vmatpush1.msra.mxu0 %v662
          %681 = vmatprep.subr.mxu0 0.0
          %682 = vmatpush1.msra.mxu0 0.0
          %683 = vmatprep.subr.mxu0 0.0
          %684 = vmatpush1.msra.mxu0 0.0
          %685 = vmatprep.subr.mxu0 0.0
          %686 = vmatpush1.msra.mxu0 0.0
          %687 = vmatprep.subr.mxu0 0.0
          %688 = vmatpush1.msra.mxu0 0.0
          %689 = vmatprep.subr.mxu0 0.0
          %690 = vmatpush1.msra.mxu0 0.0
          %691 = vmatprep.subr.mxu0 0.0
          %692 = vmatpush1.msra.mxu0 0.0
          %693 = vmatprep.subr.mxu0 0.0
          %694 = vmatpush1.msra.mxu0 0.0
          %695 = vmatprep.subr.mxu0 0.0
          %696 = vmatpush1.msra.mxu0 0.0
          %697 = vmatprep.subr.mxu0 0.0
          %698 = vmatpush1.msra.mxu0 0.0
          %699 = vmatprep.subr.mxu0 0.0
          %700 = vmatpush1.msra.mxu0 0.0
          %701 = vmatprep.subr.mxu0 0.0
          %702 = vmatpush1.msra.mxu0 0.0
          %703 = vmatprep.subr.mxu0 0.0
          %704 = vmatpush1.msra.mxu0 0.0
          %705 = vmatprep.subr.mxu0 0.0
          %706 = vmatpush1.msra.mxu0 0.0
          %707 = vmatprep.subr.mxu0 0.0
          %708 = vmatpush1.msra.mxu0 0.0
          %709 = vmatprep.subr.mxu0 0.0
          %710 = vmatpush1.msra.mxu0 0.0
          %711 = vmatprep.subr.mxu0 0.0
          %712 = vmatpush1.msra.mxu0 0.0
          %713 = vmatprep.subr.mxu0 0.0
          %714 = vmatpush1.msra.mxu0 0.0
          %715 = vmatprep.subr.mxu0 0.0
          %716 = vmatpush1.msra.mxu0 0.0
          %717 = vmatprep.subr.mxu0 0.0
          %718 = vmatpush1.msra.mxu0 0.0
          %719 = vmatprep.subr.mxu0 0.0
          %720 = vmatpush1.msra.mxu0 0.0
          %721 = vmatprep.subr.mxu0 0.0
          %722 = vmatpush1.msra.mxu0 0.0
          %723 = vmatprep.subr.mxu0 0.0
          %724 = vmatpush1.msra.mxu0 0.0
          %725 = vmatprep.subr.mxu0 0.0
          %726 = vmatpush1.msra.mxu0 0.0
          %727 = vmatprep.subr.mxu0 0.0
          %728 = vmatpush1.msra.mxu0 0.0
          %729 = vmatprep.subr.mxu0 0.0
          %730 = vmatpush1.msra.mxu0 0.0
          %731 = vmatprep.subr.mxu0 0.0
          %732 = vmatpush1.msra.mxu0 0.0
          %733 = vmatprep.subr.mxu0 0.0
          %734 = vmatpush1.msra.mxu0 0.0
          %735 = vmatprep.subr.mxu0 0.0
          %736 = vmatpush1.msra.mxu0 0.0
          %737 = vmatprep.subr.mxu0 0.0
          %738 = vmatpush1.msra.mxu0 0.0
          %739 = vmatprep.subr.mxu0 0.0
          %740 = vmatpush1.msra.mxu0 0.0
          %741 = vmatprep.mubr.f32.mxu0 0.0
          %742 = vmatmul.mubr.f32.gmra.mrb[0].mxu0 %v672
          %v743 = vpop.f32.mrb[0].mxu0
          %v744 = vadd.f32 %v668, %v743
          %v745 = vpop.f32.mrb[0].mxu0
          %746 = vmatprep.mubr.f32.mxu0 0.0
          %747 = vmatmul.mubr.f32.gmra.mrb[0].mxu0 %v675
          %v748 = vpop.f32.mrb[0].mxu0
          %v749 = vadd.f32 %v668, %v748
          %v750 = vpop.f32.mrb[0].mxu0
          %751 = vdwg.mxu0
          %v752 = vld [vmem:[%s3] sm:$0xff]
          %v753 = vld [vmem:[%s3 + $0x8] sm:$0xff]
          %v754 = vld [vmem:[%s3 + $0x10] sm:$0xff]
          %v755 = vld [vmem:[%s3 + $0x18] sm:$0xff]
          %v756 = vld [vmem:[%s3 + $0x20] sm:$0xff]
          %v757 = vld [vmem:[%s3 + $0x28] sm:$0xff]
          %v758 = vld [vmem:[%s3 + $0x30] sm:$0xff]
          %v759 = vld [vmem:[%s3 + $0x38] sm:$0xff]
          %v760 = vld [vmem:[%s3 + $0x40] sm:$0xff]
          %v761 = vld [vmem:[%s3 + $0x48] sm:$0xff]
          %v762 = vld [vmem:[%s3 + $0x50] sm:$0xff]
          %v763 = vld [vmem:[%s3 + $0x58] sm:$0xff]
          %v764 = vld [vmem:[%s3 + $0x60] sm:$0xff]
          %v765 = vld [vmem:[%s3 + $0x68] sm:$0xff]
          %v766 = vld [vmem:[%s3 + $0x70] sm:$0xff]
          %v767 = vld [vmem:[%s3 + $0x78] sm:$0xff]
          %v768 = vld [vmem:[%s4] sm:$0x1]
          %v770 = vlaneseq
          %v771 = vshrl.u32 %v770, 7
          %v772 = vsub.s32 0, %v771
          %v773 = vrot.slane %v768, %v772
          %775 = vmatprep.subr.mxu0 0.0
          %776 = vmatpush1.msra.mxu0 %v752
          %777 = vmatprep.subr.mxu0 0.0
          %778 = vmatpush1.msra.mxu0 %v753
          %779 = vmatprep.subr.mxu0 0.0
          %780 = vmatpush1.msra.mxu0 %v754
          %781 = vmatprep.subr.mxu0 0.0
          %782 = vmatpush1.msra.mxu0 %v755
          %783 = vmatprep.subr.mxu0 0.0
          %784 = vmatpush1.msra.mxu0 %v756
          %785 = vmatprep.subr.mxu0 0.0
          %786 = vmatpush1.msra.mxu0 %v757
          %787 = vmatprep.subr.mxu0 0.0
          %788 = vmatpush1.msra.mxu0 %v758
          %789 = vmatprep.subr.mxu0 0.0
          %790 = vmatpush1.msra.mxu0 %v759
          %791 = vmatprep.subr.mxu0 0.0
          %792 = vmatpush1.msra.mxu0 %v760
          %793 = vmatprep.subr.mxu0 0.0
          %794 = vmatpush1.msra.mxu0 %v761
          %795 = vmatprep.subr.mxu0 0.0
          %796 = vmatpush1.msra.mxu0 %v762
          %797 = vmatprep.subr.mxu0 0.0
          %798 = vmatpush1.msra.mxu0 %v763
          %799 = vmatprep.subr.mxu0 0.0
          %800 = vmatpush1.msra.mxu0 %v764
          %801 = vmatprep.subr.mxu0 0.0
          %802 = vmatpush1.msra.mxu0 %v765
          %803 = vmatprep.subr.mxu0 0.0
          %804 = vmatpush1.msra.mxu0 %v766
          %805 = vmatprep.subr.mxu0 0.0
          %806 = vmatpush1.msra.mxu0 %v767
          %807 = vmatprep.subr.mxu0 0.0
          %808 = vmatpush1.msra.mxu0 0.0
          %809 = vmatprep.subr.mxu0 0.0
          %810 = vmatpush1.msra.mxu0 0.0
          %811 = vmatprep.subr.mxu0 0.0
          %812 = vmatpush1.msra.mxu0 0.0
          %813 = vmatprep.subr.mxu0 0.0
          %814 = vmatpush1.msra.mxu0 0.0
          %815 = vmatprep.subr.mxu0 0.0
          %816 = vmatpush1.msra.mxu0 0.0
          %817 = vmatprep.subr.mxu0 0.0
          %818 = vmatpush1.msra.mxu0 0.0
          %819 = vmatprep.subr.mxu0 0.0
          %820 = vmatpush1.msra.mxu0 0.0
          %821 = vmatprep.subr.mxu0 0.0
          %822 = vmatpush1.msra.mxu0 0.0
          %823 = vmatprep.subr.mxu0 0.0
          %824 = vmatpush1.msra.mxu0 0.0
          %825 = vmatprep.subr.mxu0 0.0
          %826 = vmatpush1.msra.mxu0 0.0
          %827 = vmatprep.subr.mxu0 0.0
          %828 = vmatpush1.msra.mxu0 0.0
          %829 = vmatprep.subr.mxu0 0.0
          %830 = vmatpush1.msra.mxu0 0.0
          %831 = vmatprep.subr.mxu0 0.0
          %832 = vmatpush1.msra.mxu0 0.0
          %833 = vmatprep.subr.mxu0 0.0
          %834 = vmatpush1.msra.mxu0 0.0
          %835 = vmatprep.subr.mxu0 0.0
          %836 = vmatpush1.msra.mxu0 0.0
          %837 = vmatprep.subr.mxu0 0.0
          %838 = vmatpush1.msra.mxu0 0.0
          %839 = vmatprep.mubr.f32.mxu0 0.0
          %840 = vmatmul.mubr.f32.gmra.mrb[0].mxu0 %v744
          %v841 = vpop.f32.mrb[0].mxu0
          %v842 = vadd.f32 %v773, %v841
          %v843 = vpop.f32.mrb[0].mxu0
          %844 = vmatprep.mubr.f32.mxu0 0.0
          %845 = vmatmul.mubr.f32.gmra.mrb[0].mxu0 %v749
          %v846 = vpop.f32.mrb[0].mxu0
          %v847 = vadd.f32 %v773, %v846
          %v848 = vpop.f32.mrb[0].mxu0
          %849 = vdwg.mxu0
          %v850 = vmax.f32 %v842, 0.0
          %v851 = vmax.f32 %v847, 0.0
          %v852 = vld [vmem:[%s5] sm:$0xff]
          %v853 = vld [vmem:[%s5 + $0x8] sm:$0xff]
          %v854 = vld [vmem:[%s5 + $0x10] sm:$0xff]
          %v855 = vld [vmem:[%s5 + $0x18] sm:$0xff]
          %v856 = vld [vmem:[%s5 + $0x20] sm:$0xff]
          %v857 = vld [vmem:[%s5 + $0x28] sm:$0xff]
          %v858 = vld [vmem:[%s5 + $0x30] sm:$0xff]
          %v859 = vld [vmem:[%s5 + $0x38] sm:$0xff]
          %v860 = vld [vmem:[%s6] sm:$0x1]
          %v862 = vlaneseq
          %v863 = vshrl.u32 %v862, 7
          %v864 = vsub.s32 0, %v863
          %v865 = vrot.slane %v860, %v864
          %vm867 = vcmask 523264
          %v869 = vsel %vm867, %v850, 0
          %v872 = vsel %vm867, %v851, 0
          %874 = vmatprep.subr.mxu0 0.0
          %875 = vmatpush1.msra.mxu0 %v852
          %876 = vmatprep.subr.mxu0 0.0
          %877 = vmatpush1.msra.mxu0 %v853
          %878 = vmatprep.subr.mxu0 0.0
          %879 = vmatpush1.msra.mxu0 %v854
          %880 = vmatprep.subr.mxu0 0.0
          %881 = vmatpush1.msra.mxu0 %v855
          %882 = vmatprep.subr.mxu0 0.0
          %883 = vmatpush1.msra.mxu0 %v856
          %884 = vmatprep.subr.mxu0 0.0
          %885 = vmatpush1.msra.mxu0 %v857
          %886 = vmatprep.subr.mxu0 0.0
          %887 = vmatpush1.msra.mxu0 %v858
          %888 = vmatprep.subr.mxu0 0.0
          %889 = vmatpush1.msra.mxu0 %v859
          %890 = vmatprep.subr.mxu0 0.0
          %891 = vmatpush1.msra.mxu0 0.0
          %892 = vmatprep.subr.mxu0 0.0
          %893 = vmatpush1.msra.mxu0 0.0
          %894 = vmatprep.subr.mxu0 0.0
          %895 = vmatpush1.msra.mxu0 0.0
          %896 = vmatprep.subr.mxu0 0.0
          %897 = vmatpush1.msra.mxu0 0.0
          %898 = vmatprep.subr.mxu0 0.0
          %899 = vmatpush1.msra.mxu0 0.0
          %900 = vmatprep.subr.mxu0 0.0
          %901 = vmatpush1.msra.mxu0 0.0
          %902 = vmatprep.subr.mxu0 0.0
          %903 = vmatpush1.msra.mxu0 0.0
          %904 = vmatprep.subr.mxu0 0.0
          %905 = vmatpush1.msra.mxu0 0.0
          %906 = vmatprep.subr.mxu0 0.0
          %907 = vmatpush1.msra.mxu0 0.0
          %908 = vmatprep.subr.mxu0 0.0
          %909 = vmatpush1.msra.mxu0 0.0
          %910 = vmatprep.subr.mxu0 0.0
          %911 = vmatpush1.msra.mxu0 0.0
          %912 = vmatprep.subr.mxu0 0.0
          %913 = vmatpush1.msra.mxu0 0.0
          %914 = vmatprep.subr.mxu0 0.0
          %915 = vmatpush1.msra.mxu0 0.0
          %916 = vmatprep.subr.mxu0 0.0
          %917 = vmatpush1.msra.mxu0 0.0
          %918 = vmatprep.subr.mxu0 0.0
          %919 = vmatpush1.msra.mxu0 0.0
          %920 = vmatprep.subr.mxu0 0.0
          %921 = vmatpush1.msra.mxu0 0.0
          %922 = vmatprep.subr.mxu0 0.0
          %923 = vmatpush1.msra.mxu0 0.0
          %924 = vmatprep.subr.mxu0 0.0
          %925 = vmatpush1.msra.mxu0 0.0
          %926 = vmatprep.subr.mxu0 0.0
          %927 = vmatpush1.msra.mxu0 0.0
          %928 = vmatprep.subr.mxu0 0.0
          %929 = vmatpush1.msra.mxu0 0.0
          %930 = vmatprep.subr.mxu0 0.0
          %931 = vmatpush1.msra.mxu0 0.0
          %932 = vmatprep.subr.mxu0 0.0
          %933 = vmatpush1.msra.mxu0 0.0
          %934 = vmatprep.subr.mxu0 0.0
          %935 = vmatpush1.msra.mxu0 0.0
          %936 = vmatprep.subr.mxu0 0.0
          %937 = vmatpush1.msra.mxu0 0.0
          %938 = vmatprep.mubr.f32.mxu0 0.0
          %939 = vmatmul.mubr.f32.gmra.mrb[0].mxu0 %v869
          %v940 = vpop.f32.mrb[0].mxu0
          %v941 = vadd.f32 %v865, %v940
          %v942 = vpop.f32.mrb[0].mxu0
          %943 = vmatprep.mubr.f32.mxu0 0.0
          %944 = vmatmul.mubr.f32.gmra.mrb[0].mxu0 %v872
          %v945 = vpop.f32.mrb[0].mxu0
          %v946 = vadd.f32 %v865, %v945
          %v947 = vpop.f32.mrb[0].mxu0
          %948 = vdwg.mxu0
          %v949 = vld [vmem:[%s7] sm:$0xff]
          %v950 = vld [vmem:[%s7 + $0x8] sm:$0xff]
          %v951 = vld [vmem:[%s8] sm:$0xff]
          %v952 = vld [vmem:[%s8 + $0x8] sm:$0xff]
          %v953 = vld [vmem:[%s8 + $0x10] sm:$0xff]
          %v954 = vld [vmem:[%s8 + $0x18] sm:$0xff]
          %v955 = vld [vmem:[%s8 + $0x20] sm:$0xff]
          %v956 = vld [vmem:[%s8 + $0x28] sm:$0xff]
          %v957 = vld [vmem:[%s8 + $0x30] sm:$0xff]
          %v958 = vld [vmem:[%s8 + $0x38] sm:$0xff]
          %v959 = vld [vmem:[%s8 + $0x40] sm:$0xff]
          %v960 = vld [vmem:[%s8 + $0x48] sm:$0xff]
          %v961 = vld [vmem:[%s8 + $0x50] sm:$0xff]
          %v962 = vld [vmem:[%s8 + $0x58] sm:$0xff]
          %v963 = vld [vmem:[%s8 + $0x60] sm:$0xff]
          %v964 = vld [vmem:[%s8 + $0x68] sm:$0xff]
          %v965 = vld [vmem:[%s8 + $0x70] sm:$0xff]
          %v966 = vld [vmem:[%s8 + $0x78] sm:$0xff]
          %v967 = vld [vmem:[%s9] sm:$0x1]
          %v969 = vlaneseq
          %v970 = vshrl.u32 %v969, 7
          %v971 = vsub.s32 0, %v970
          %v972 = vrot.slane %v967, %v971
          %974 = vmatprep.subr.mxu0 0.0
          %975 = vmatpush1.msra.mxu0 %v951
          %976 = vmatprep.subr.mxu0 0.0
          %977 = vmatpush1.msra.mxu0 %v952
          %978 = vmatprep.subr.mxu0 0.0
          %979 = vmatpush1.msra.mxu0 %v953
          %980 = vmatprep.subr.mxu0 0.0
          %981 = vmatpush1.msra.mxu0 %v954
          %982 = vmatprep.subr.mxu0 0.0
          %983 = vmatpush1.msra.mxu0 %v955
          %984 = vmatprep.subr.mxu0 0.0
          %985 = vmatpush1.msra.mxu0 %v956
          %986 = vmatprep.subr.mxu0 0.0
          %987 = vmatpush1.msra.mxu0 %v957
          %988 = vmatprep.subr.mxu0 0.0
          %989 = vmatpush1.msra.mxu0 %v958
          %990 = vmatprep.subr.mxu0 0.0
          %991 = vmatpush1.msra.mxu0 %v959
          %992 = vmatprep.subr.mxu0 0.0
          %993 = vmatpush1.msra.mxu0 %v960
          %994 = vmatprep.subr.mxu0 0.0
          %995 = vmatpush1.msra.mxu0 %v961
          %996 = vmatprep.subr.mxu0 0.0
          %997 = vmatpush1.msra.mxu0 %v962
          %998 = vmatprep.subr.mxu0 0.0
          %999 = vmatpush1.msra.mxu0 %v963
          %1000 = vmatprep.subr.mxu0 0.0
          %1001 = vmatpush1.msra.mxu0 %v964
          %1002 = vmatprep.subr.mxu0 0.0
          %1003 = vmatpush1.msra.mxu0 %v965
          %1004 = vmatprep.subr.mxu0 0.0
          %1005 = vmatpush1.msra.mxu0 %v966
          %1006 = vmatprep.subr.mxu0 0.0
          %1007 = vmatpush1.msra.mxu0 0.0
          %1008 = vmatprep.subr.mxu0 0.0
          %1009 = vmatpush1.msra.mxu0 0.0
          %1010 = vmatprep.subr.mxu0 0.0
          %1011 = vmatpush1.msra.mxu0 0.0
          %1012 = vmatprep.subr.mxu0 0.0
          %1013 = vmatpush1.msra.mxu0 0.0
          %1014 = vmatprep.subr.mxu0 0.0
          %1015 = vmatpush1.msra.mxu0 0.0
          %1016 = vmatprep.subr.mxu0 0.0
          %1017 = vmatpush1.msra.mxu0 0.0
          %1018 = vmatprep.subr.mxu0 0.0
          %1019 = vmatpush1.msra.mxu0 0.0
          %1020 = vmatprep.subr.mxu0 0.0
          %1021 = vmatpush1.msra.mxu0 0.0
          %1022 = vmatprep.subr.mxu0 0.0
          %1023 = vmatpush1.msra.mxu0 0.0
          %1024 = vmatprep.subr.mxu0 0.0
          %1025 = vmatpush1.msra.mxu0 0.0
          %1026 = vmatprep.subr.mxu0 0.0
          %1027 = vmatpush1.msra.mxu0 0.0
          %1028 = vmatprep.subr.mxu0 0.0
          %1029 = vmatpush1.msra.mxu0 0.0
          %1030 = vmatprep.subr.mxu0 0.0
          %1031 = vmatpush1.msra.mxu0 0.0
          %1032 = vmatprep.subr.mxu0 0.0
          %1033 = vmatpush1.msra.mxu0 0.0
          %1034 = vmatprep.subr.mxu0 0.0
          %1035 = vmatpush1.msra.mxu0 0.0
          %1036 = vmatprep.subr.mxu0 0.0
          %1037 = vmatpush1.msra.mxu0 0.0
          %1038 = vmatprep.mubr.f32.mxu0 0.0
          %1039 = vmatmul.mubr.f32.gmra.mrb[0].mxu0 %v949
          %v1040 = vpop.f32.mrb[0].mxu0
          %v1041 = vadd.f32 %v972, %v1040
          %v1042 = vpop.f32.mrb[0].mxu0
          %1043 = vmatprep.mubr.f32.mxu0 0.0
          %1044 = vmatmul.mubr.f32.gmra.mrb[0].mxu0 %v950
          %v1045 = vpop.f32.mrb[0].mxu0
          %v1046 = vadd.f32 %v972, %v1045
          %v1047 = vpop.f32.mrb[0].mxu0
          %1048 = vdwg.mxu0
          %v1049 = vmax.f32 %v1041, 0.0
          %v1050 = vmax.f32 %v1046, 0.0
          %v1051 = vld [vmem:[%s10] sm:$0xff]
          %v1052 = vld [vmem:[%s10 + $0x8] sm:$0xff]
          %v1053 = vld [vmem:[%s10 + $0x10] sm:$0xff]
          %v1054 = vld [vmem:[%s10 + $0x18] sm:$0xff]
          %v1055 = vld [vmem:[%s10 + $0x20] sm:$0xff]
          %v1056 = vld [vmem:[%s10 + $0x28] sm:$0xff]
          %v1057 = vld [vmem:[%s10 + $0x30] sm:$0xff]
          %v1058 = vld [vmem:[%s10 + $0x38] sm:$0xff]
          %v1059 = vld [vmem:[%s11] sm:$0x1]
          %v1061 = vlaneseq
          %v1062 = vshrl.u32 %v1061, 7
          %v1063 = vsub.s32 0, %v1062
          %v1064 = vrot.slane %v1059, %v1063
          %v1067 = vsel %vm867, %v1049, 0
          %v1070 = vsel %vm867, %v1050, 0
          %1072 = vmatprep.subr.mxu0 0.0
          %1073 = vmatpush1.msra.mxu0 %v1051
          %1074 = vmatprep.subr.mxu0 0.0
          %1075 = vmatpush1.msra.mxu0 %v1052
          %1076 = vmatprep.subr.mxu0 0.0
          %1077 = vmatpush1.msra.mxu0 %v1053
          %1078 = vmatprep.subr.mxu0 0.0
          %1079 = vmatpush1.msra.mxu0 %v1054
          %1080 = vmatprep.subr.mxu0 0.0
          %1081 = vmatpush1.msra.mxu0 %v1055
          %1082 = vmatprep.subr.mxu0 0.0
          %1083 = vmatpush1.msra.mxu0 %v1056
          %1084 = vmatprep.subr.mxu0 0.0
          %1085 = vmatpush1.msra.mxu0 %v1057
          %1086 = vmatprep.subr.mxu0 0.0
          %1087 = vmatpush1.msra.mxu0 %v1058
          %1088 = vmatprep.subr.mxu0 0.0
          %1089 = vmatpush1.msra.mxu0 0.0
          %1090 = vmatprep.subr.mxu0 0.0
          %1091 = vmatpush1.msra.mxu0 0.0
          %1092 = vmatprep.subr.mxu0 0.0
          %1093 = vmatpush1.msra.mxu0 0.0
          %1094 = vmatprep.subr.mxu0 0.0
          %1095 = vmatpush1.msra.mxu0 0.0
          %1096 = vmatprep.subr.mxu0 0.0
          %1097 = vmatpush1.msra.mxu0 0.0
          %1098 = vmatprep.subr.mxu0 0.0
          %1099 = vmatpush1.msra.mxu0 0.0
          %1100 = vmatprep.subr.mxu0 0.0
          %1101 = vmatpush1.msra.mxu0 0.0
          %1102 = vmatprep.subr.mxu0 0.0
          %1103 = vmatpush1.msra.mxu0 0.0
          %1104 = vmatprep.subr.mxu0 0.0
          %1105 = vmatpush1.msra.mxu0 0.0
          %1106 = vmatprep.subr.mxu0 0.0
          %1107 = vmatpush1.msra.mxu0 0.0
          %1108 = vmatprep.subr.mxu0 0.0
          %1109 = vmatpush1.msra.mxu0 0.0
          %1110 = vmatprep.subr.mxu0 0.0
          %1111 = vmatpush1.msra.mxu0 0.0
          %1112 = vmatprep.subr.mxu0 0.0
          %1113 = vmatpush1.msra.mxu0 0.0
          %1114 = vmatprep.subr.mxu0 0.0
          %1115 = vmatpush1.msra.mxu0 0.0
          %1116 = vmatprep.subr.mxu0 0.0
          %1117 = vmatpush1.msra.mxu0 0.0
          %1118 = vmatprep.subr.mxu0 0.0
          %1119 = vmatpush1.msra.mxu0 0.0
          %1120 = vmatprep.subr.mxu0 0.0
          %1121 = vmatpush1.msra.mxu0 0.0
          %1122 = vmatprep.subr.mxu0 0.0
          %1123 = vmatpush1.msra.mxu0 0.0
          %1124 = vmatprep.subr.mxu0 0.0
          %1125 = vmatpush1.msra.mxu0 0.0
          %1126 = vmatprep.subr.mxu0 0.0
          %1127 = vmatpush1.msra.mxu0 0.0
          %1128 = vmatprep.subr.mxu0 0.0
          %1129 = vmatpush1.msra.mxu0 0.0
          %1130 = vmatprep.subr.mxu0 0.0
          %1131 = vmatpush1.msra.mxu0 0.0
          %1132 = vmatprep.subr.mxu0 0.0
          %1133 = vmatpush1.msra.mxu0 0.0
          %1134 = vmatprep.subr.mxu0 0.0
          %1135 = vmatpush1.msra.mxu0 0.0
          %1136 = vmatprep.mubr.f32.mxu0 0.0
          %1137 = vmatmul.mubr.f32.gmra.mrb[0].mxu0 %v1067
          %v1138 = vpop.f32.mrb[0].mxu0
          %v1139 = vadd.f32 %v1064, %v1138
          %v1140 = vpop.f32.mrb[0].mxu0
          %1141 = vmatprep.mubr.f32.mxu0 0.0
          %1142 = vmatmul.mubr.f32.gmra.mrb[0].mxu0 %v1070
          %v1143 = vpop.f32.mrb[0].mxu0
          %v1144 = vadd.f32 %v1064, %v1143
          %v1145 = vpop.f32.mrb[0].mxu0
          %1146 = vdwg.mxu0
          %v1147 = vadd.f32 %v1139, %v949
          %v1148 = vadd.f32 %v1144, %v950
          %v1149 = vld [vmem:[%s12] sm:$0xff]
          %v1150 = vld [vmem:[%s12 + $0x8] sm:$0xff]
          %v1151 = vld [vmem:[%s12 + $0x10] sm:$0xff]
          %v1152 = vld [vmem:[%s12 + $0x18] sm:$0xff]
          %v1153 = vld [vmem:[%s12 + $0x20] sm:$0xff]
          %v1154 = vld [vmem:[%s12 + $0x28] sm:$0xff]
          %v1155 = vld [vmem:[%s12 + $0x30] sm:$0xff]
          %v1156 = vld [vmem:[%s12 + $0x38] sm:$0xff]
          %v1157 = vld [vmem:[%s12 + $0x40] sm:$0xff]
          %v1158 = vld [vmem:[%s12 + $0x48] sm:$0xff]
          %v1159 = vld [vmem:[%s12 + $0x50] sm:$0xff]
          %v1160 = vld [vmem:[%s12 + $0x58] sm:$0xff]
          %v1161 = vld [vmem:[%s12 + $0x60] sm:$0xff]
          %v1162 = vld [vmem:[%s12 + $0x68] sm:$0xff]
          %v1163 = vld [vmem:[%s12 + $0x70] sm:$0xff]
          %v1164 = vld [vmem:[%s12 + $0x78] sm:$0xff]
          %v1165 = vld [vmem:[%s13] sm:$0x1]
          %v1167 = vlaneseq
          %v1168 = vshrl.u32 %v1167, 7
          %v1169 = vsub.s32 0, %v1168
          %v1170 = vrot.slane %v1165, %v1169
          %1172 = vmatprep.subr.mxu0 0.0
          %1173 = vmatpush1.msra.mxu0 %v1149
          %1174 = vmatprep.subr.mxu0 0.0
          %1175 = vmatpush1.msra.mxu0 %v1150
          %1176 = vmatprep.subr.mxu0 0.0
          %1177 = vmatpush1.msra.mxu0 %v1151
          %1178 = vmatprep.subr.mxu0 0.0
          %1179 = vmatpush1.msra.mxu0 %v1152
          %1180 = vmatprep.subr.mxu0 0.0
          %1181 = vmatpush1.msra.mxu0 %v1153
          %1182 = vmatprep.subr.mxu0 0.0
          %1183 = vmatpush1.msra.mxu0 %v1154
          %1184 = vmatprep.subr.mxu0 0.0
          %1185 = vmatpush1.msra.mxu0 %v1155
          %1186 = vmatprep.subr.mxu0 0.0
          %1187 = vmatpush1.msra.mxu0 %v1156
          %1188 = vmatprep.subr.mxu0 0.0
          %1189 = vmatpush1.msra.mxu0 %v1157
          %1190 = vmatprep.subr.mxu0 0.0
          %1191 = vmatpush1.msra.mxu0 %v1158
          %1192 = vmatprep.subr.mxu0 0.0
          %1193 = vmatpush1.msra.mxu0 %v1159
          %1194 = vmatprep.subr.mxu0 0.0
          %1195 = vmatpush1.msra.mxu0 %v1160
          %1196 = vmatprep.subr.mxu0 0.0
          %1197 = vmatpush1.msra.mxu0 %v1161
          %1198 = vmatprep.subr.mxu0 0.0
          %1199 = vmatpush1.msra.mxu0 %v1162
          %1200 = vmatprep.subr.mxu0 0.0
          %1201 = vmatpush1.msra.mxu0 %v1163
          %1202 = vmatprep.subr.mxu0 0.0
          %1203 = vmatpush1.msra.mxu0 %v1164
          %1204 = vmatprep.subr.mxu0 0.0
          %1205 = vmatpush1.msra.mxu0 0.0
          %1206 = vmatprep.subr.mxu0 0.0
          %1207 = vmatpush1.msra.mxu0 0.0
          %1208 = vmatprep.subr.mxu0 0.0
          %1209 = vmatpush1.msra.mxu0 0.0
          %1210 = vmatprep.subr.mxu0 0.0
          %1211 = vmatpush1.msra.mxu0 0.0
          %1212 = vmatprep.subr.mxu0 0.0
          %1213 = vmatpush1.msra.mxu0 0.0
          %1214 = vmatprep.subr.mxu0 0.0
          %1215 = vmatpush1.msra.mxu0 0.0
          %1216 = vmatprep.subr.mxu0 0.0
          %1217 = vmatpush1.msra.mxu0 0.0
          %1218 = vmatprep.subr.mxu0 0.0
          %1219 = vmatpush1.msra.mxu0 0.0
          %1220 = vmatprep.subr.mxu0 0.0
          %1221 = vmatpush1.msra.mxu0 0.0
          %1222 = vmatprep.subr.mxu0 0.0
          %1223 = vmatpush1.msra.mxu0 0.0
          %1224 = vmatprep.subr.mxu0 0.0
          %1225 = vmatpush1.msra.mxu0 0.0
          %1226 = vmatprep.subr.mxu0 0.0
          %1227 = vmatpush1.msra.mxu0 0.0
          %1228 = vmatprep.subr.mxu0 0.0
          %1229 = vmatpush1.msra.mxu0 0.0
          %1230 = vmatprep.subr.mxu0 0.0
          %1231 = vmatpush1.msra.mxu0 0.0
          %1232 = vmatprep.subr.mxu0 0.0
          %1233 = vmatpush1.msra.mxu0 0.0
          %1234 = vmatprep.subr.mxu0 0.0
          %1235 = vmatpush1.msra.mxu0 0.0
          %1236 = vmatprep.mubr.f32.mxu0 0.0
          %1237 = vmatmul.mubr.f32.gmra.mrb[0].mxu0 %v941
          %v1238 = vpop.f32.mrb[0].mxu0
          %v1239 = vadd.f32 %v1170, %v1238
          %v1240 = vpop.f32.mrb[0].mxu0
          %1241 = vmatprep.mubr.f32.mxu0 0.0
          %1242 = vmatmul.mubr.f32.gmra.mrb[0].mxu0 %v946
          %v1243 = vpop.f32.mrb[0].mxu0
          %v1244 = vadd.f32 %v1170, %v1243
          %v1245 = vpop.f32.mrb[0].mxu0
          %1246 = vmatprep.mubr.f32.mxu0 0.0
          %1247 = vmatmul.mubr.f32.gmra.mrb[0].mxu0 %v1147
          %v1248 = vpop.f32.mrb[0].mxu0
          %v1249 = vadd.f32 %v1170, %v1248
          %v1250 = vpop.f32.mrb[0].mxu0
          %1251 = vmatprep.mubr.f32.mxu0 0.0
          %1252 = vmatmul.mubr.f32.gmra.mrb[0].mxu0 %v1148
          %v1253 = vpop.f32.mrb[0].mxu0
          %v1254 = vadd.f32 %v1170, %v1253
          %v1255 = vpop.f32.mrb[0].mxu0
          %1256 = vdwg.mxu0
          %v1257 = vmax.f32 %v1239, 0.0
          %v1258 = vmax.f32 %v1244, 0.0
          %v1259 = vmax.f32 %v1249, 0.0
          %v1260 = vmax.f32 %v1254, 0.0
          %v1261 = vld [vmem:[%s14] sm:$0xff]
          %v1262 = vld [vmem:[%s14 + $0x8] sm:$0xff]
          %v1263 = vld [vmem:[%s14 + $0x10] sm:$0xff]
          %v1264 = vld [vmem:[%s14 + $0x18] sm:$0xff]
          %v1265 = vld [vmem:[%s14 + $0x20] sm:$0xff]
          %v1266 = vld [vmem:[%s14 + $0x28] sm:$0xff]
          %v1267 = vld [vmem:[%s14 + $0x30] sm:$0xff]
          %v1268 = vld [vmem:[%s14 + $0x38] sm:$0xff]
          %v1269 = vld [vmem:[%s15] sm:$0x1]
          %v1271 = vlaneseq
          %v1272 = vshrl.u32 %v1271, 7
          %v1273 = vsub.s32 0, %v1272
          %v1274 = vrot.slane %v1269, %v1273
          %v1277 = vsel %vm867, %v1257, 0
          %v1280 = vsel %vm867, %v1258, 0
          %v1283 = vsel %vm867, %v1259, 0
          %v1286 = vsel %vm867, %v1260, 0
          %1288 = vmatprep.subr.mxu0 0.0
          %1289 = vmatpush1.msra.mxu0 %v1261
          %1290 = vmatprep.subr.mxu0 0.0
          %1291 = vmatpush1.msra.mxu0 %v1262
          %1292 = vmatprep.subr.mxu0 0.0
          %1293 = vmatpush1.msra.mxu0 %v1263
          %1294 = vmatprep.subr.mxu0 0.0
          %1295 = vmatpush1.msra.mxu0 %v1264
          %1296 = vmatprep.subr.mxu0 0.0
          %1297 = vmatpush1.msra.mxu0 %v1265
          %1298 = vmatprep.subr.mxu0 0.0
          %1299 = vmatpush1.msra.mxu0 %v1266
          %1300 = vmatprep.subr.mxu0 0.0
          %1301 = vmatpush1.msra.mxu0 %v1267
          %1302 = vmatprep.subr.mxu0 0.0
          %1303 = vmatpush1.msra.mxu0 %v1268
          %1304 = vmatprep.subr.mxu0 0.0
          %1305 = vmatpush1.msra.mxu0 0.0
          %1306 = vmatprep.subr.mxu0 0.0
          %1307 = vmatpush1.msra.mxu0 0.0
          %1308 = vmatprep.subr.mxu0 0.0
          %1309 = vmatpush1.msra.mxu0 0.0
          %1310 = vmatprep.subr.mxu0 0.0
          %1311 = vmatpush1.msra.mxu0 0.0
          %1312 = vmatprep.subr.mxu0 0.0
          %1313 = vmatpush1.msra.mxu0 0.0
          %1314 = vmatprep.subr.mxu0 0.0
          %1315 = vmatpush1.msra.mxu0 0.0
          %1316 = vmatprep.subr.mxu0 0.0
          %1317 = vmatpush1.msra.mxu0 0.0
          %1318 = vmatprep.subr.mxu0 0.0
          %1319 = vmatpush1.msra.mxu0 0.0
          %1320 = vmatprep.subr.mxu0 0.0
          %1321 = vmatpush1.msra.mxu0 0.0
          %1322 = vmatprep.subr.mxu0 0.0
          %1323 = vmatpush1.msra.mxu0 0.0
          %1324 = vmatprep.subr.mxu0 0.0
          %1325 = vmatpush1.msra.mxu0 0.0
          %1326 = vmatprep.subr.mxu0 0.0
          %1327 = vmatpush1.msra.mxu0 0.0
          %1328 = vmatprep.subr.mxu0 0.0
          %1329 = vmatpush1.msra.mxu0 0.0
          %1330 = vmatprep.subr.mxu0 0.0
          %1331 = vmatpush1.msra.mxu0 0.0
          %1332 = vmatprep.subr.mxu0 0.0
          %1333 = vmatpush1.msra.mxu0 0.0
          %1334 = vmatprep.subr.mxu0 0.0
          %1335 = vmatpush1.msra.mxu0 0.0
          %1336 = vmatprep.subr.mxu0 0.0
          %1337 = vmatpush1.msra.mxu0 0.0
          %1338 = vmatprep.subr.mxu0 0.0
          %1339 = vmatpush1.msra.mxu0 0.0
          %1340 = vmatprep.subr.mxu0 0.0
          %1341 = vmatpush1.msra.mxu0 0.0
          %1342 = vmatprep.subr.mxu0 0.0
          %1343 = vmatpush1.msra.mxu0 0.0
          %1344 = vmatprep.subr.mxu0 0.0
          %1345 = vmatpush1.msra.mxu0 0.0
          %1346 = vmatprep.subr.mxu0 0.0
          %1347 = vmatpush1.msra.mxu0 0.0
          %1348 = vmatprep.subr.mxu0 0.0
          %1349 = vmatpush1.msra.mxu0 0.0
          %1350 = vmatprep.subr.mxu0 0.0
          %1351 = vmatpush1.msra.mxu0 0.0
          %1352 = vmatprep.mubr.f32.mxu0 0.0
          %1353 = vmatmul.mubr.f32.gmra.mrb[0].mxu0 %v1277
          %v1354 = vpop.f32.mrb[0].mxu0
          %v1355 = vadd.f32 %v1274, %v1354
          %v1356 = vpop.f32.mrb[0].mxu0
          %1357 = vmatprep.mubr.f32.mxu0 0.0
          %1358 = vmatmul.mubr.f32.gmra.mrb[0].mxu0 %v1280
          %v1359 = vpop.f32.mrb[0].mxu0
          %v1360 = vadd.f32 %v1274, %v1359
          %v1361 = vpop.f32.mrb[0].mxu0
          %1362 = vmatprep.mubr.f32.mxu0 0.0
          %1363 = vmatmul.mubr.f32.gmra.mrb[0].mxu0 %v1283
          %v1364 = vpop.f32.mrb[0].mxu0
          %v1365 = vadd.f32 %v1274, %v1364
          %v1366 = vpop.f32.mrb[0].mxu0
          %1367 = vmatprep.mubr.f32.mxu0 0.0
          %1368 = vmatmul.mubr.f32.gmra.mrb[0].mxu0 %v1286
          %v1369 = vpop.f32.mrb[0].mxu0
          %v1370 = vadd.f32 %v1274, %v1369
          %v1371 = vpop.f32.mrb[0].mxu0
          %1372 = vdwg.mxu0
          %v1373 = vadd.f32 %v1355, %v941
          %v1374 = vadd.f32 %v1360, %v946
          %v1375 = vadd.f32 %v1365, %v1147
          %v1376 = vadd.f32 %v1370, %v1148
          %1377 = vst [vmem:[#allocation2] sm:$0xff] %v1373
          %1378 = vst [vmem:[#allocation2 + $0x8] sm:$0xff] %v1374
          %1379 = vst [vmem:[#allocation2 + $0x10] sm:$0xff] %v1375
          %1380 = vst [vmem:[#allocation2 + $0x18] sm:$0xff] %v1376
        $region100: #{tprompt_forward.1} parent=91 // pred_fallthru
          _
        %v1381 = vld [vmem:[#allocation2] sm:$0xff]
        %v1382 = vld [vmem:[#allocation2 + $0x8] sm:$0xff]
        %v1383 = vld [vmem:[#allocation2 + $0x10] sm:$0xff]
        %v1384 = vld [vmem:[#allocation2 + $0x18] sm:$0xff]
        %v1385 = vld [vmem:[%s581] sm:$0xff]
        %v1386 = vld [vmem:[%s581 + $0x8] sm:$0xff]
        %v1387 = vld [vmem:[%s581 + $0x10] sm:$0xff]
        %v1388 = vld [vmem:[%s581 + $0x18] sm:$0xff]
        %v1389 = vld [vmem:[%s581 + $0x20] sm:$0xff]
        %v1390 = vld [vmem:[%s581 + $0x28] sm:$0xff]
        %v1391 = vld [vmem:[%s581 + $0x30] sm:$0xff]
        %v1392 = vld [vmem:[%s581 + $0x38] sm:$0xff]
        %v1393 = vld [vmem:[%s581 + $0x40] sm:$0xff]
        %v1394 = vld [vmem:[%s581 + $0x48] sm:$0xff]
        %v1395 = vld [vmem:[%s581 + $0x50] sm:$0xff]
        %v1396 = vld [vmem:[%s581 + $0x58] sm:$0xff]
        %v1397 = vld [vmem:[%s581 + $0x60] sm:$0xff]
        %v1398 = vld [vmem:[%s581 + $0x68] sm:$0xff]
        %v1399 = vld [vmem:[%s581 + $0x70] sm:$0xff]
        %v1400 = vld [vmem:[%s581 + $0x78] sm:$0xff]
        %v1401 = vld [vmem:[%s581 + $0x80] sm:$0xff]
        %v1402 = vld [vmem:[%s581 + $0x88] sm:$0xff]
        %v1403 = vld [vmem:[%s581 + $0x90] sm:$0xff]
        %v1404 = vld [vmem:[%s581 + $0x98] sm:$0xff]
        %v1405 = vld [vmem:[%s581 + $0xa0] sm:$0xff]
        %v1406 = vld [vmem:[%s581 + $0xa8] sm:$0xff]
        %v1407 = vld [vmem:[%s581 + $0xb0] sm:$0xff]
        %v1408 = vld [vmem:[%s581 + $0xb8] sm:$0xff]
        %v1409 = vld [vmem:[%s581 + $0xc0] sm:$0xff]
        %v1410 = vld [vmem:[%s581 + $0xc8] sm:$0xff]
        %v1411 = vld [vmem:[%s581 + $0xd0] sm:$0xff]
        %v1412 = vld [vmem:[%s581 + $0xd8] sm:$0xff]
        %v1413 = vld [vmem:[%s581 + $0xe0] sm:$0xff]
        %v1414 = vld [vmem:[%s581 + $0xe8] sm:$0xff]
        %v1415 = vld [vmem:[%s581 + $0xf0] sm:$0xff]
        %v1416 = vld [vmem:[%s581 + $0xf8] sm:$0xff]
        %v1417 = vld [vmem:[%s648] sm:$0x3]
        %v1419 = vlaneseq
        %v1420 = vshrl.u32 %v1419, 7
        %v1421 = vsub.s32 0, %v1420
        %v1422 = vrot.slane %v1417, %v1421
        %v1423 = vlaneseq
        %v1424 = vshrl.u32 %v1423, 7
        %v1425 = vsub.s32 1, %v1424
        %v1426 = vrot.slane %v1417, %v1425
        %1429 = vmatprep.subr.mxu0 %v1386
        %1430 = vmatpush1.msra.mxu0 %v1385
        %1431 = vmatprep.subr.mxu0 %v1388
        %1432 = vmatpush1.msra.mxu0 %v1387
        %1433 = vmatprep.subr.mxu0 %v1390
        %1434 = vmatpush1.msra.mxu0 %v1389
        %1435 = vmatprep.subr.mxu0 %v1392
        %1436 = vmatpush1.msra.mxu0 %v1391
        %1437 = vmatprep.subr.mxu0 %v1394
        %1438 = vmatpush1.msra.mxu0 %v1393
        %1439 = vmatprep.subr.mxu0 %v1396
        %1440 = vmatpush1.msra.mxu0 %v1395
        %1441 = vmatprep.subr.mxu0 %v1398
        %1442 = vmatpush1.msra.mxu0 %v1397
        %1443 = vmatprep.subr.mxu0 %v1400
        %1444 = vmatpush1.msra.mxu0 %v1399
        %1445 = vmatprep.subr.mxu0 %v1402
        %1446 = vmatpush1.msra.mxu0 %v1401
        %1447 = vmatprep.subr.mxu0 %v1404
        %1448 = vmatpush1.msra.mxu0 %v1403
        %1449 = vmatprep.subr.mxu0 %v1406
        %1450 = vmatpush1.msra.mxu0 %v1405
        %1451 = vmatprep.subr.mxu0 %v1408
        %1452 = vmatpush1.msra.mxu0 %v1407
        %1453 = vmatprep.subr.mxu0 %v1410
        %1454 = vmatpush1.msra.mxu0 %v1409
        %1455 = vmatprep.subr.mxu0 %v1412
        %1456 = vmatpush1.msra.mxu0 %v1411
        %1457 = vmatprep.subr.mxu0 %v1414
        %1458 = vmatpush1.msra.mxu0 %v1413
        %1459 = vmatprep.subr.mxu0 %v1416
        %1460 = vmatpush1.msra.mxu0 %v1415
        %1461 = vmatprep.subr.mxu0 0.0
        %1462 = vmatpush1.msra.mxu0 0.0
        %1463 = vmatprep.subr.mxu0 0.0
        %1464 = vmatpush1.msra.mxu0 0.0
        %1465 = vmatprep.subr.mxu0 0.0
        %1466 = vmatpush1.msra.mxu0 0.0
        %1467 = vmatprep.subr.mxu0 0.0
        %1468 = vmatpush1.msra.mxu0 0.0
        %1469 = vmatprep.subr.mxu0 0.0
        %1470 = vmatpush1.msra.mxu0 0.0
        %1471 = vmatprep.subr.mxu0 0.0
        %1472 = vmatpush1.msra.mxu0 0.0
        %1473 = vmatprep.subr.mxu0 0.0
        %1474 = vmatpush1.msra.mxu0 0.0
        %1475 = vmatprep.subr.mxu0 0.0
        %1476 = vmatpush1.msra.mxu0 0.0
        %1477 = vmatprep.subr.mxu0 0.0
        %1478 = vmatpush1.msra.mxu0 0.0
        %1479 = vmatprep.subr.mxu0 0.0
        %1480 = vmatpush1.msra.mxu0 0.0
        %1481 = vmatprep.subr.mxu0 0.0
        %1482 = vmatpush1.msra.mxu0 0.0
        %1483 = vmatprep.subr.mxu0 0.0
        %1484 = vmatpush1.msra.mxu0 0.0
        %1485 = vmatprep.subr.mxu0 0.0
        %1486 = vmatpush1.msra.mxu0 0.0
        %1487 = vmatprep.subr.mxu0 0.0
        %1488 = vmatpush1.msra.mxu0 0.0
        %1489 = vmatprep.subr.mxu0 0.0
        %1490 = vmatpush1.msra.mxu0 0.0
        %1491 = vmatprep.subr.mxu0 0.0
        %1492 = vmatpush1.msra.mxu0 0.0
        %1493 = vmatprep.mubr.f32.mxu0 0.0
        %1494 = vmatmul.mubr.f32.gmra.mrb[0].mxu0 %v1381
        %v1495 = vpop.f32.mrb[0].mxu0
        %v1496 = vadd.f32 %v1422, %v1495
        %v1497 = vpop.f32.mrb[0].mxu0
        %v1498 = vadd.f32 %v1426, %v1497
        %1499 = vmatprep.mubr.f32.mxu0 0.0
        %1500 = vmatmul.mubr.f32.gmra.mrb[0].mxu0 %v1382
        %v1501 = vpop.f32.mrb[0].mxu0
        %v1502 = vadd.f32 %v1422, %v1501
        %v1503 = vpop.f32.mrb[0].mxu0
        %v1504 = vadd.f32 %v1426, %v1503
        %1505 = vmatprep.mubr.f32.mxu0 0.0
        %1506 = vmatmul.mubr.f32.gmra.mrb[0].mxu0 %v1383
        %v1507 = vpop.f32.mrb[0].mxu0
        %v1508 = vadd.f32 %v1422, %v1507
        %v1509 = vpop.f32.mrb[0].mxu0
        %v1510 = vadd.f32 %v1426, %v1509
        %1511 = vmatprep.mubr.f32.mxu0 0.0
        %1512 = vmatmul.mubr.f32.gmra.mrb[0].mxu0 %v1384
        %v1513 = vpop.f32.mrb[0].mxu0
        %v1514 = vadd.f32 %v1422, %v1513
        %v1515 = vpop.f32.mrb[0].mxu0
        %v1516 = vadd.f32 %v1426, %v1515
        %1517 = vdwg.mxu0
        %1518 = vst [vmem:[%s639] sm:$0xff] %v1496
        %1519 = vst [vmem:[%s639 + $0x8] sm:$0xff] %v1502
        %1520 = vst [vmem:[%s639 + $0x10] sm:$0xff] %v1508
        %1521 = vst [vmem:[%s639 + $0x18] sm:$0xff] %v1514
        %s1522 = scalar_lea.vmem %s639, 32 [#allocation6]
        %1523 = vst [vmem:[%s1522] sm:$0xff] %v1498
        %1524 = vst [vmem:[%s1522 + $0x8] sm:$0xff] %v1504
        %1525 = vst [vmem:[%s1522 + $0x10] sm:$0xff] %v1510
        %1526 = vst [vmem:[%s1522 + $0x18] sm:$0xff] %v1516
        %s1527 = sand.u32 %s455, 1
        %s1528 = scalar_lea.sflag [#allocation5], %s1527
        %s1529 = sand.u32 %s455, 1
        %s1530 = smul.addr %s1529, 64
        %s1531 = scalar_lea.vmem [#allocation6], %s1530
        // Predicated region
        $region101: #{tprompt_forward.1} parent=91 // pred_check
          %p1532 = pneg %p465
        $region102: #{tprompt_forward.1} parent=91 // pred_check_branch
          %1534 = sbr.rel (%p1532) target = $region104
        $region103: #{tprompt_forward.1} parent=91 // pred_region
          %s1535 = smul.u32 %s39, 2
          %s1536 = sadd.s32 %s1535, %s40
          %s1537 = smul.u32 2, %s1536
          %s1539 = ssub.s32 1024, 1024
          %1540 = vsyncadd %s1528, %s1539
          %s1541 = smul.addr %s1537, 4
          %s1542 = smul.addr %s1541, 128
          %s1543 = scalar_lea.hbm %s18, %s1542
          %s1544 = sshll.u32 %s1531, 4
          %s1545 = int_to_ptr.vmem [resolvable:$true] %s1544
          %1550 = dma.vmem_to_hbm [thread:$0]  %s1545, 1024, %s1543, %s1528, 128, 128, 8
        $region104: #{tprompt_forward.1} parent=91 // pred_fallthru
          _
      $region92: #{tprompt_forward.1} parent=5 // pred_fallthru
        _
      %p1551 = scmp.le.s32.totalorder 2, %s30
      // Predicated region
      $region105: #{tprompt_forward.1} parent=5 // pred_check
        %p1552 = pneg %p1551
      $region106: #{tprompt_forward.1} parent=5 // pred_check_branch
        %1554 = sbr.rel (%p1552) target = $region108
      $region107: #{tprompt_forward.1} parent=5 // pred_region
        %s1555 = ssub.s32 %s30, 2
        // Predicated region
        $region109: #{tprompt_forward.1} parent=107 // pred_check
          %p1556 = pneg %p471
        $region110: #{tprompt_forward.1} parent=107 // pred_check_branch
          %1558 = sbr.rel (%p1556) target = $region112
        $region111: #{tprompt_forward.1} parent=107 // pred_region
          %s1559 = sand.u32 %s456, 1
          %s1560 = scalar_lea.sflag [#allocation5], %s1559
          %s1561 = sand.u32 %s456, 1
          %s1562 = smul.addr %s1561, 64
          %s1563 = scalar_lea.vmem [#allocation6], %s1562
          %1564 = dma.done %s1560, 1024
        $region112: #{tprompt_forward.1} parent=107 // pred_fallthru
          _
      $region108: #{tprompt_forward.1} parent=5 // pred_fallthru
        _
    $region6: #{tprompt_forward.1} parent=1 // loop_footer
      %s34 = sadd.s32 1, %s30
    $region7: #{tprompt_forward.1} parent=1 // loop_footer_branch
      %29 = sbr.rel target = $region3
    $region8: #{tprompt_forward.1} parent=1 // loop_exit
      _
    %1565 = vsyncpa [#allocation4], 1
    %s1566 = scalar_lea.sflag [#allocation4], 1
    %1567 = vsyncpa %s1566, 1
    %1568 = vsyncpa [#allocation5], 1
    %s1569 = scalar_lea.sflag [#allocation5], 1
    %1570 = vsyncpa %s1569, 1

</llo_original>
